<compile_context>
chip_gen: v5e
topology: v5e:2x2
jax: 0.10.0
libtpu: 0.0.40
codegen_flags: <defaults>
</compile_context>

<pallas_src>
import jax
import jax.numpy as jnp
from jax.experimental import pallas as pl
from jax.experimental.pallas import tpu as pltpu

NEG_BIG = -1e30


# ---------------------------------------------------------------------------
# Pass 0: decoder state (GRU + attention + p_gen + vocab_dist_linear_1).
# Grid-less: runs once, tiny compute, full arrays in VMEM.
# ---------------------------------------------------------------------------
def _decoder_state_kernel(
    yemb_ref, h_ref, mem_ref, mask_ref,
    w_ih_ref, w_hh_ref, b_ih_ref, b_hh_ref,
    w_attn_ref,
    w1c_ref, w1h_ref, b1_ref,
    wpc_ref, wph_ref, wpe_ref, bp_ref,
    hnext_ref, ctx_ref, attn_ref, pgen_ref, vl1b_ref, attnsc_ref):
  f32 = jnp.float32
  H = h_ref.shape[1]

  y_emb = yemb_ref[...]                                           # [B, E]
  h = h_ref[...]                                                  # [B, H]

  # ---- GRU cell: two fused matmuls, gates sliced from [B, 3H] results ----
  gi = jnp.dot(y_emb, w_ih_ref[...], preferred_element_type=f32) + b_ih_ref[...]
  gh = jnp.dot(h, w_hh_ref[...], preferred_element_type=f32) + b_hh_ref[...]
  r = jax.nn.sigmoid(gi[:, 0:H] + gh[:, 0:H])
  z = jax.nn.sigmoid(gi[:, H:2 * H] + gh[:, H:2 * H])
  n = jnp.tanh(gi[:, 2 * H:3 * H] + r * gh[:, 2 * H:3 * H])
  h_next = (1.0 - z) * n + z * h                                  # [B, H]

  # ---- "general" attention with masked softmax (batched MXU einsums) ----
  mem = mem_ref[...]                                              # [B, S, M]
  q = jnp.dot(h_next, w_attn_ref[...], preferred_element_type=f32)[:, None, :]
  scores = jnp.einsum('bqm,bsm->bqs', q, mem, preferred_element_type=f32)
  scores = scores - jnp.max(scores, axis=2, keepdims=True)
  exp_s = jnp.exp(scores) * mask_ref[...][:, None, :]
  denom = jnp.maximum(jnp.sum(exp_s, axis=2, keepdims=True), 1e-30)
  inv_denom = 1.0 / denom                                         # exact (perf review)
  attn3 = exp_s * inv_denom                                       # [B, 1, S]
  ctx3 = jnp.einsum('bqs,bsm->bqm', attn3, mem, preferred_element_type=f32)
  attn = attn3[:, 0, :]                                           # [B, S]
  context = ctx3[:, 0, :]                                         # [B, M]

  # ---- vocab_dist_linear_1 / p_gen_linear: per-input matmuls (no concat copies) ----
  vl1 = (jnp.dot(context, w1c_ref[...], preferred_element_type=f32)
         + jnp.dot(h_next, w1h_ref[...], preferred_element_type=f32)
         + b1_ref[...])                                           # [B, H]
  p_gen = jax.nn.sigmoid(
      jnp.dot(context, wpc_ref[...], preferred_element_type=f32)
      + jnp.dot(h_next, wph_ref[...], preferred_element_type=f32)
      + jnp.dot(y_emb, wpe_ref[...], preferred_element_type=f32)
      + bp_ref[...])                                              # [B, 1]

  hnext_ref[...] = h_next
  ctx_ref[...] = context
  attn_ref[...] = attn
  pgen_ref[...] = p_gen
  vl1b_ref[...] = vl1.astype(jnp.bfloat16)    # hoisted cast for the vocab loop
  attnsc_ref[...] = (1.0 - p_gen) * attn


# ---------------------------------------------------------------------------
# Pass 1: vocab logits + online softmax statistics.
# Grid = (2, nv2): leading "parallel" axis = half of the vocab (megacore on v7x),
# trailing "arbitrary" axis = vocab tiles within the half.
# Streams w2 once, caches bf16 logits for pass 2, emits per-half (m, l).
# ---------------------------------------------------------------------------
def _vocab_stats_kernel(vl1b_ref, w2_ref, b2_ref, logits_ref, stats_ref, m_sc, l_sc):
  f32 = jnp.float32
  i = pl.program_id(1)

  @pl.when(i == 0)
  def _init():
    m_sc[...] = jnp.full_like(m_sc, NEG_BIG)
    l_sc[...] = jnp.zeros_like(l_sc)

  logits = jnp.dot(vl1b_ref[...], w2_ref[...],
                   preferred_element_type=f32) + b2_ref[...]      # [B, tile] f32
  logits_b = logits.astype(jnp.bfloat16)
  logits_ref[...] = logits_b                                      # cache for pass 2
  # stats are computed from the *rounded* logits so pass 2 is exactly consistent
  lf = logits_b.astype(f32)
  m_new = jnp.maximum(m_sc[...], jnp.max(lf, axis=1, keepdims=True))
  l_sc[...] = (jnp.exp(m_sc[...] - m_new) * l_sc[...]
               + jnp.sum(jnp.exp(lf - m_new), axis=1, keepdims=True))
  m_sc[...] = m_new

  @pl.when(i == pl.num_programs(1) - 1)
  def _finalize():
    stats_ref[:, 0:1] = m_sc[...]
    stats_ref[:, 1:2] = l_sc[...]


# ---------------------------------------------------------------------------
# Pass 2: normalize cached bf16 logit tiles into p_gen * softmax tiles.
# Lane-dense [Bp, tile] output stores, "parallel" grid (megacore on v7x).
# ---------------------------------------------------------------------------
def _final_vocab_kernel(logits_ref, pgen_ref, stats_ref, out_ref):
  m = stats_ref[:, 0:1]                       # merged running max          [B, 1]
  inv_l = stats_ref[:, 1:2]                   # exact 1 / sum(exp(l - m))   [B, 1]
  scale = pgen_ref[...] * inv_l               # p_gen / l
  out_ref[...] = jnp.exp(logits_ref[...].astype(jnp.float32) - m) * scale


# ---------------------------------------------------------------------------
# Host-side packing: pre-transpose weights to [in, out], split concat weights,
# pad w2/b2 to an even number of vocab tiles (2-way stats split).
# ---------------------------------------------------------------------------
def pack_params(p, vocab_tile):
  V, _ = p["embedding"].shape
  H = p["w_hh"].shape[1]
  M = p["w_attn"].shape[0]
  nv = -(-V // vocab_tile)
  nv2 = -(-nv // 2)                 # tiles per half
  Vp = 2 * nv2 * vocab_tile
  w2_t = jnp.zeros((H, Vp), jnp.bfloat16).at[:, :V].set(p["w2"].T.astype(jnp.bfloat16))
  b2 = jnp.full((1, Vp), NEG_BIG, jnp.float32).at[0, :V].set(p["b2"])
  w1_t = p["w1"].T                  # [M+H, H]
  wp_t = p["wp"].T                  # [M+H+E, 1]
  return {
      "embedding": p["embedding"],
      "w_ih_t": p["w_ih"].T, "w_hh_t": p["w_hh"].T,
      "b_ih": p["b_ih"].reshape(1, -1), "b_hh": p["b_hh"].reshape(1, -1),
      "w_attn_t": p["w_attn"].T,
      "w1_ctx": w1_t[:M], "w1_h": w1_t[M:], "b1": p["b1"].reshape(1, -1),
      "wp_ctx": wp_t[:M], "wp_h": wp_t[M:M + H], "wp_emb": wp_t[M + H:],
      "bp": p["bp"].reshape(1, 1),
      "w2_t": w2_t, "b2": b2,
      "vocab_tile": vocab_tile, "vocab_size": V,
  }


# ---------------------------------------------------------------------------
# Forward wrapper (single decode step).
# ---------------------------------------------------------------------------
def rnn_decoder_forward(packed, y, h, memory_bank, src_mask, max_num_oovs, src_oov,
                        *, vmem_limit_bytes=48 * 1024 * 1024):
  num_layers, B, H = h.shape
  assert num_layers == 1  # TODO(synk): multi-layer GRU stacking not implemented
  V = packed["vocab_size"]
  tile = packed["vocab_tile"]
  S = src_oov.shape[1]
  M = memory_bank.shape[2]

  Vp = packed["w2_t"].shape[1]
  n_tiles = Vp // tile
  assert n_tiles * tile == Vp and n_tiles % 2 == 0
  nv2 = n_tiles // 2

  Bp = ((max(B, 8) + 7) // 8) * 8   # pad batch to a sublane multiple

  # Embedding lookup as an XLA gather outside the kernel.
  y_emb = jnp.take(packed["embedding"], y.astype(jnp.int32), axis=0)

  def pad_b(x, fill):
    pad = [(0, Bp - B)] + [(0, 0)] * (x.ndim - 1)
    return jnp.pad(x, pad, constant_values=fill)

  y_emb_p = pad_b(y_emb.astype(jnp.float32), 0.0)
  h0_p = pad_b(h[0].astype(jnp.float32), 0.0)
  mem_p = pad_b(memory_bank.astype(jnp.float32), 0.0)
  mask_p = pad_b(src_mask.astype(jnp.float32), 1.0)   # padded rows: full mask (no 0/0)

  # ---- pass 0: decoder state (grid-less) ----
  state_outs = (
      jax.ShapeDtypeStruct((Bp, H), jnp.float32),   # h_next
      jax.ShapeDtypeStruct((Bp, M), jnp.float32),   # context
      jax.ShapeDtypeStruct((Bp, S), jnp.float32),   # attn_dist
      jax.ShapeDtypeStruct((Bp, 1), jnp.float32),   # p_gen
      jax.ShapeDtypeStruct((Bp, H), jnp.bfloat16),  # vl1 (bf16, cast hoisted)
      jax.ShapeDtypeStruct((Bp, S), jnp.float32),   # (1 - p_gen) * attn
  )
  h_next, context, attn, p_gen, vl1_bf16, attn_sc = pl.pallas_call(
      _decoder_state_kernel,
      out_shape=state_outs,
      compiler_params=pltpu.CompilerParams(vmem_limit_bytes=32 * 1024 * 1024),
  )(y_emb_p, h0_p, mem_p, mask_p,
    packed["w_ih_t"], packed["w_hh_t"], packed["b_ih"], packed["b_hh"],
    packed["w_attn_t"],
    packed["w1_ctx"], packed["w1_h"], packed["b1"],
    packed["wp_ctx"], packed["wp_h"], packed["wp_emb"], packed["bp"])

  # ---- pass 1: logits + online softmax stats (w2 streamed exactly once) ----
  logits_bf16, stats2 = pl.pallas_call(
      _vocab_stats_kernel,
      out_shape=(jax.ShapeDtypeStruct((Bp, Vp), jnp.bfloat16),
                 jax.ShapeDtypeStruct((2 * Bp, 2), jnp.float32)),
      grid=(2, nv2),
      in_specs=[
          pl.BlockSpec((Bp, H), lambda c, i: (0, 0)),
          pl.BlockSpec((H, tile), lambda c, i: (0, c * nv2 + i)),
          pl.BlockSpec((1, tile), lambda c, i: (0, c * nv2 + i)),
      ],
      out_specs=(
          pl.BlockSpec((Bp, tile), lambda c, i: (0, c * nv2 + i)),
          pl.BlockSpec((Bp, 2), lambda c, i: (c, 0)),
      ),
      scratch_shapes=[pltpu.VMEM((Bp, 1), jnp.float32),
                      pltpu.VMEM((Bp, 1), jnp.float32)],
      compiler_params=pltpu.CompilerParams(
          dimension_semantics=("parallel", "arbitrary"),
          vmem_limit_bytes=vmem_limit_bytes),
  )(vl1_bf16, packed["w2_t"], packed["b2"])

  # ---- merge the two per-half softmax partials (exact, tiny) ----
  m0, l0 = stats2[0:Bp, 0:1], stats2[0:Bp, 1:2]
  m1, l1 = stats2[Bp:, 0:1], stats2[Bp:, 1:2]
  m = jnp.maximum(m0, m1)
  l = l0 * jnp.exp(m0 - m) + l1 * jnp.exp(m1 - m)
  stats = jnp.concatenate([m, 1.0 / l], axis=1)     # exact reciprocal (perf review)

  # ---- pass 2: p_gen * softmax tiles from the cached bf16 logits ----
  gen_padded = pl.pallas_call(
      _final_vocab_kernel,
      out_shape=jax.ShapeDtypeStruct((Bp, Vp), jnp.float32),
      grid=(n_tiles,),
      in_specs=[
          pl.BlockSpec((Bp, tile), lambda j: (0, j)),
          pl.BlockSpec((Bp, 1), lambda j: (0, 0)),
          pl.BlockSpec((Bp, 2), lambda j: (0, 0)),
      ],
      out_specs=pl.BlockSpec((Bp, tile), lambda j: (0, j)),
      compiler_params=pltpu.CompilerParams(
          dimension_semantics=("parallel",),
          vmem_limit_bytes=vmem_limit_bytes),
  )(logits_bf16, p_gen, stats)

  # ---- copy mechanism: tiny (B x S) scatter-add done in XLA (per perf review) ----
  vocab_dist_ = gen_padded[:B, :V]                  # p_gen * softmax(logits)
  attn_dist_ = attn_sc[:B]                          # (1 - p_gen) * attn
  if max_num_oovs > 0:
    vocab_dist_ = jnp.concatenate(
        [vocab_dist_, jnp.zeros((B, max_num_oovs), jnp.float32)], axis=1)
  final_dist = vocab_dist_.at[jnp.arange(B)[:, None], src_oov].add(attn_dist_)

  coverage = None   # coverage_attn=False: coverage passes through as None
  return (final_dist, h_next[:B].reshape(num_layers, B, H), context[:B],
          attn[:B], p_gen[:B], coverage)


# ---------------------------------------------------------------------------
# Pure-JAX reference (mirrors the PyTorch forward) and parameter init.
# ---------------------------------------------------------------------------
def _reference_forward(p, y, h, memory_bank, src_mask, max_num_oovs, src_oov):
  B = y.shape[0]
  H = h.shape[2]
  y_emb = p["embedding"][y]
  h0 = h[0]
  gi = y_emb @ p["w_ih"].T + p["b_ih"]
  gh = h0 @ p["w_hh"].T + p["b_hh"]
  r = jax.nn.sigmoid(gi[:, :H] + gh[:, :H])
  z = jax.nn.sigmoid(gi[:, H:2 * H] + gh[:, H:2 * H])
  n = jnp.tanh(gi[:, 2 * H:] + r * gh[:, 2 * H:])
  h_next = (1 - z) * n + z * h0

  proj = h_next @ p["w_attn"].T
  scores = jnp.einsum('bsm,bm->bs', memory_bank, proj)
  sm = jax.nn.softmax(scores, axis=1)
  masked = sm * src_mask
  attn = masked / masked.sum(axis=1, keepdims=True)
  context = jnp.einsum('bs,bsm->bm', attn, memory_bank)

  vl1 = jnp.concatenate([context, h_next], axis=1) @ p["w1"].T + p["b1"]
  logits = vl1 @ p["w2"].T + p["b2"]
  vocab_dist = jax.nn.softmax(logits, axis=1)
  p_gen = jax.nn.sigmoid(
      jnp.concatenate([context, h_next, y_emb], axis=1) @ p["wp"].T + p["bp"])

  vocab_dist_ = p_gen * vocab_dist
  attn_dist_ = (1 - p_gen) * attn
  final = jnp.concatenate([vocab_dist_, jnp.zeros((B, max_num_oovs))], axis=1)
  final = final.at[jnp.arange(B)[:, None], src_oov].add(attn_dist_)
  return final, h_next[None], context, attn, p_gen


def init_params(key, V, E, H, M):
  ks = jax.random.split(key, 12)
  s = 0.1
  f32 = jnp.float32
  return {
      "embedding": s * jax.random.normal(ks[0], (V, E), f32),
      "w_ih": s * jax.random.normal(ks[1], (3 * H, E), f32),     # GRU, gate order r,z,n
      "w_hh": s * jax.random.normal(ks[2], (3 * H, H), f32),
      "b_ih": s * jax.random.normal(ks[3], (3 * H,), f32),
      "b_hh": s * jax.random.normal(ks[4], (3 * H,), f32),
      "w_attn": s * jax.random.normal(ks[5], (M, H), f32),       # "general" attn, no bias
      "w1": s * jax.random.normal(ks[6], (H, M + H), f32),       # vocab_dist_linear_1
      "b1": s * jax.random.normal(ks[7], (H,), f32),
      "w2": s * jax.random.normal(ks[8], (V, H), f32),           # vocab_dist_linear_2
      "b2": s * jax.random.normal(ks[9], (V,), f32),
      "wp": s * jax.random.normal(ks[10], (1, M + H + E), f32),  # p_gen_linear
      "bp": s * jax.random.normal(ks[11], (1,), f32),
  }


if __name__ == "__main__":
  B, S = 3, 16
  V, E, H, M = 384, 32, 32, 64
  num_layers = 1
  max_num_oovs = 50
  tile = 128   # small tile so the test exercises multi-tile / two-half online softmax

  key = jax.random.PRNGKey(0)
  k_p, k_y, k_h, k_mem, k_oov = jax.random.split(key, 5)
  params = init_params(k_p, V, E, H, M)
  packed = pack_params(params, tile)

  y = jax.random.randint(k_y, (B,), 0, V, dtype=jnp.int32)
  h = 0.1 * jax.random.normal(k_h, (num_layers, B, H), jnp.float32)
  memory_bank = 0.1 * jax.random.normal(k_mem, (B, S, M), jnp.float32)
  lengths = jnp.array([S, 9, 5], dtype=jnp.int32)
  src_mask = (jnp.arange(S)[None, :] < lengths[:, None]).astype(jnp.float32)
  src_oov = jax.random.randint(k_oov, (B, S), 0, V + max_num_oovs, dtype=jnp.int32)

  outs = rnn_decoder_forward(packed, y, h, memory_bank, src_mask, max_num_oovs, src_oov)
  final_dist, h_next, context, attn_dist, p_gen, coverage = outs
  jax.block_until_ready(final_dist)

  ref_final, ref_h, ref_ctx, ref_attn, ref_pgen = _reference_forward(
      params, y, h, memory_bank, src_mask, max_num_oovs, src_oov)

  assert final_dist.shape == (B, V + max_num_oovs)
  assert h_next.shape == (num_layers, B, H)
  assert context.shape == (B, M)
  assert attn_dist.shape == (B, S)
  assert p_gen.shape == (B, 1)
  assert coverage is None

  # tolerances account for bf16 vocab-projection inputs / cached bf16 logits
  assert jnp.allclose(h_next, ref_h, atol=1e-4)
  assert jnp.allclose(p_gen, ref_pgen, atol=1e-4)
  assert jnp.allclose(context, ref_ctx, atol=2e-3, rtol=2e-2)
  assert jnp.allclose(attn_dist, ref_attn, atol=2e-3, rtol=2e-2)
  assert jnp.allclose(final_dist, ref_final, atol=2e-3, rtol=2e-2)
  assert jnp.allclose(final_dist.sum(axis=1), 1.0, atol=1e-3)

  print("KERNEL_OK")
</pallas_src>

<mosaic_0001>
module attributes {stable_mosaic.version = 11 : i64} {
  func.func @_decoder_state_kernel(%arg0: memref<8x32xf32, #tpu.memory_space<vmem>>, %arg1: memref<8x32xf32, #tpu.memory_space<vmem>>, %arg2: memref<8x16x64xf32, #tpu.memory_space<vmem>>, %arg3: memref<8x16xf32, #tpu.memory_space<vmem>>, %arg4: memref<32x96xf32, #tpu.memory_space<vmem>>, %arg5: memref<32x96xf32, #tpu.memory_space<vmem>>, %arg6: memref<1x96xf32, #tpu.memory_space<vmem>>, %arg7: memref<1x96xf32, #tpu.memory_space<vmem>>, %arg8: memref<32x64xf32, #tpu.memory_space<vmem>>, %arg9: memref<64x32xf32, #tpu.memory_space<vmem>>, %arg10: memref<32x32xf32, #tpu.memory_space<vmem>>, %arg11: memref<1x32xf32, #tpu.memory_space<vmem>>, %arg12: memref<64x1xf32, #tpu.memory_space<vmem>>, %arg13: memref<32x1xf32, #tpu.memory_space<vmem>>, %arg14: memref<32x1xf32, #tpu.memory_space<vmem>>, %arg15: memref<1x1xf32, #tpu.memory_space<vmem>>, %arg16: memref<8x32xf32, #tpu.memory_space<vmem>>, %arg17: memref<8x64xf32, #tpu.memory_space<vmem>>, %arg18: memref<8x16xf32, #tpu.memory_space<vmem>>, %arg19: memref<8x1xf32, #tpu.memory_space<vmem>>, %arg20: memref<8x32xbf16, #tpu.memory_space<vmem>>, %arg21: memref<8x16xf32, #tpu.memory_space<vmem>>) attributes {dimension_semantics = [], scalar_prefetch = 0 : i64, scratch_operands = 0 : i64, tpu.core_type = #tpu.core_type<tc>} {
    %c0 = arith.constant 0 : index
    %c0_0 = arith.constant 0 : index
    %0 = vector.load %arg0[%c0, %c0_0] : memref<8x32xf32, #tpu.memory_space<vmem>>, vector<8x32xf32>
    %c0_1 = arith.constant 0 : index
    %c0_2 = arith.constant 0 : index
    %1 = vector.load %arg1[%c0_1, %c0_2] : memref<8x32xf32, #tpu.memory_space<vmem>>, vector<8x32xf32>
    %c0_3 = arith.constant 0 : index
    %c0_4 = arith.constant 0 : index
    %2 = vector.load %arg4[%c0_3, %c0_4] : memref<32x96xf32, #tpu.memory_space<vmem>>, vector<32x96xf32>
    %cst = arith.constant dense<0.000000e+00> : vector<8x96xf32>
    %3 = tpu.matmul %0, %2, %cst {dimension_numbers = #tpu.dot_dimension_numbers<[1], [0], [0], [1], [0, 0, 1, 1], [], []>} : vector<8x32xf32>, vector<32x96xf32>, vector<8x96xf32> -> vector<8x96xf32>
    %c0_5 = arith.constant 0 : index
    %c0_6 = arith.constant 0 : index
    %4 = vector.load %arg6[%c0_5, %c0_6] : memref<1x96xf32, #tpu.memory_space<vmem>>, vector<1x96xf32>
    %5 = vector.broadcast %4 : vector<1x96xf32> to vector<8x96xf32>
    %6 = arith.addf %3, %5 : vector<8x96xf32>
    %c0_7 = arith.constant 0 : index
    %c0_8 = arith.constant 0 : index
    %7 = vector.load %arg5[%c0_7, %c0_8] : memref<32x96xf32, #tpu.memory_space<vmem>>, vector<32x96xf32>
    %cst_9 = arith.constant dense<0.000000e+00> : vector<8x96xf32>
    %8 = tpu.matmul %1, %7, %cst_9 {dimension_numbers = #tpu.dot_dimension_numbers<[1], [0], [0], [1], [0, 0, 1, 1], [], []>} : vector<8x32xf32>, vector<32x96xf32>, vector<8x96xf32> -> vector<8x96xf32>
    %c0_10 = arith.constant 0 : index
    %c0_11 = arith.constant 0 : index
    %9 = vector.load %arg7[%c0_10, %c0_11] : memref<1x96xf32, #tpu.memory_space<vmem>>, vector<1x96xf32>
    %10 = vector.broadcast %9 : vector<1x96xf32> to vector<8x96xf32>
    %11 = arith.addf %8, %10 : vector<8x96xf32>
    %12 = vector.extract_strided_slice %6 {offsets = [0, 0], sizes = [8, 32], strides = [1, 1]} : vector<8x96xf32> to vector<8x32xf32>
    %13 = vector.extract_strided_slice %11 {offsets = [0, 0], sizes = [8, 32], strides = [1, 1]} : vector<8x96xf32> to vector<8x32xf32>
    %14 = arith.addf %12, %13 : vector<8x32xf32>
    %15 = arith.negf %14 : vector<8x32xf32>
    %16 = math.exp %15 : vector<8x32xf32>
    %cst_12 = arith.constant 1.000000e+00 : f32
    %17 = vector.broadcast %cst_12 : f32 to vector<8x32xf32>
    %18 = arith.addf %17, %16 : vector<8x32xf32>
    %19 = arith.divf %17, %18 : vector<8x32xf32>
    %20 = vector.extract_strided_slice %6 {offsets = [0, 32], sizes = [8, 32], strides = [1, 1]} : vector<8x96xf32> to vector<8x32xf32>
    %21 = vector.extract_strided_slice %11 {offsets = [0, 32], sizes = [8, 32], strides = [1, 1]} : vector<8x96xf32> to vector<8x32xf32>
    %22 = arith.addf %20, %21 : vector<8x32xf32>
    %23 = arith.negf %22 : vector<8x32xf32>
    %24 = math.exp %23 : vector<8x32xf32>
    %cst_13 = arith.constant 1.000000e+00 : f32
    %25 = vector.broadcast %cst_13 : f32 to vector<8x32xf32>
    %26 = arith.addf %25, %24 : vector<8x32xf32>
    %27 = arith.divf %25, %26 : vector<8x32xf32>
    %28 = vector.extract_strided_slice %6 {offsets = [0, 64], sizes = [8, 32], strides = [1, 1]} : vector<8x96xf32> to vector<8x32xf32>
    %29 = vector.extract_strided_slice %11 {offsets = [0, 64], sizes = [8, 32], strides = [1, 1]} : vector<8x96xf32> to vector<8x32xf32>
    %30 = arith.mulf %19, %29 : vector<8x32xf32>
    %31 = arith.addf %28, %30 : vector<8x32xf32>
    %32 = math.tanh %31 : vector<8x32xf32>
    %cst_14 = arith.constant 1.000000e+00 : f32
    %33 = vector.broadcast %cst_14 : f32 to vector<8x32xf32>
    %34 = arith.subf %33, %27 : vector<8x32xf32>
    %35 = arith.mulf %34, %32 : vector<8x32xf32>
    %36 = arith.mulf %27, %1 : vector<8x32xf32>
    %37 = arith.addf %35, %36 : vector<8x32xf32>
    %c0_15 = arith.constant 0 : index
    %c0_16 = arith.constant 0 : index
    %c0_17 = arith.constant 0 : index
    %38 = vector.load %arg2[%c0_15, %c0_16, %c0_17] : memref<8x16x64xf32, #tpu.memory_space<vmem>>, vector<8x16x64xf32>
    %c0_18 = arith.constant 0 : index
    %c0_19 = arith.constant 0 : index
    %39 = vector.load %arg8[%c0_18, %c0_19] : memref<32x64xf32, #tpu.memory_space<vmem>>, vector<32x64xf32>
    %cst_20 = arith.constant dense<0.000000e+00> : vector<8x64xf32>
    %40 = tpu.matmul %37, %39, %cst_20 {dimension_numbers = #tpu.dot_dimension_numbers<[1], [0], [0], [1], [0, 0, 1, 1], [], []>} : vector<8x32xf32>, vector<32x64xf32>, vector<8x64xf32> -> vector<8x64xf32>
    %41 = vector.shape_cast %40 : vector<8x64xf32> to vector<8x1x64xf32>
    "tpu.trace_start"() <{level = 10 : i32, message = "bqm,bsm->bqs"}> : () -> ()
    %cst_21 = arith.constant dense<0.000000e+00> : vector<8x1x16xf32>
    %42 = tpu.matmul %41, %38, %cst_21 {dimension_numbers = #tpu.dot_dimension_numbers<[2], [2], [1], [1], [0, 0, 0, 1, 1, 1], [0], [0]>} : vector<8x1x64xf32>, vector<8x16x64xf32>, vector<8x1x16xf32> -> vector<8x1x16xf32>
    "tpu.trace_stop"() : () -> ()
    %cst_22 = arith.constant dense<0xFF800000> : vector<8x1xf32>
    %43 = vector.multi_reduction <maximumf>, %42, %cst_22 [2] : vector<8x1x16xf32> to vector<8x1xf32>
    %44 = vector.shape_cast %43 : vector<8x1xf32> to vector<8x1x1xf32>
    %45 = vector.broadcast %44 : vector<8x1x1xf32> to vector<8x1x16xf32>
    %46 = arith.subf %42, %45 : vector<8x1x16xf32>
    %47 = math.exp %46 : vector<8x1x16xf32>
    %c0_23 = arith.constant 0 : index
    %c0_24 = arith.constant 0 : index
    %48 = vector.load %arg3[%c0_23, %c0_24] : memref<8x16xf32, #tpu.memory_space<vmem>>, vector<8x16xf32>
    %49 = vector.shape_cast %48 : vector<8x16xf32> to vector<8x1x16xf32>
    %50 = arith.mulf %47, %49 : vector<8x1x16xf32>
    %cst_25 = arith.constant dense<0.000000e+00> : vector<8x1xf32>
    %51 = vector.multi_reduction <add>, %50, %cst_25 [2] : vector<8x1x16xf32> to vector<8x1xf32>
    %52 = vector.shape_cast %51 : vector<8x1xf32> to vector<8x1x1xf32>
    %cst_26 = arith.constant 1.000000e-30 : f32
    %53 = vector.broadcast %cst_26 : f32 to vector<8x1x1xf32>
    %54 = arith.maximumf %52, %53 : vector<8x1x1xf32>
    %cst_27 = arith.constant 1.000000e+00 : f32
    %55 = vector.broadcast %cst_27 : f32 to vector<8x1x1xf32>
    %56 = arith.divf %55, %54 : vector<8x1x1xf32>
    %57 = vector.broadcast %56 : vector<8x1x1xf32> to vector<8x1x16xf32>
    %58 = arith.mulf %50, %57 : vector<8x1x16xf32>
    "tpu.trace_start"() <{level = 10 : i32, message = "bqs,bsm->bqm"}> : () -> ()
    %cst_28 = arith.constant dense<0.000000e+00> : vector<8x1x64xf32>
    %59 = tpu.matmul %58, %38, %cst_28 {dimension_numbers = #tpu.dot_dimension_numbers<[2], [1], [1], [2], [0, 0, 0, 1, 1, 2], [0], [0]>} : vector<8x1x16xf32>, vector<8x16x64xf32>, vector<8x1x64xf32> -> vector<8x1x64xf32>
    "tpu.trace_stop"() : () -> ()
    %60 = vector.shape_cast %58 : vector<8x1x16xf32> to vector<8x16xf32>
    %61 = vector.shape_cast %59 : vector<8x1x64xf32> to vector<8x64xf32>
    %c0_29 = arith.constant 0 : index
    %c0_30 = arith.constant 0 : index
    %62 = vector.load %arg9[%c0_29, %c0_30] : memref<64x32xf32, #tpu.memory_space<vmem>>, vector<64x32xf32>
    %cst_31 = arith.constant dense<0.000000e+00> : vector<8x32xf32>
    %63 = tpu.matmul %61, %62, %cst_31 {dimension_numbers = #tpu.dot_dimension_numbers<[1], [0], [0], [1], [0, 0, 1, 1], [], []>} : vector<8x64xf32>, vector<64x32xf32>, vector<8x32xf32> -> vector<8x32xf32>
    %c0_32 = arith.constant 0 : index
    %c0_33 = arith.constant 0 : index
    %64 = vector.load %arg10[%c0_32, %c0_33] : memref<32x32xf32, #tpu.memory_space<vmem>>, vector<32x32xf32>
    %cst_34 = arith.constant dense<0.000000e+00> : vector<8x32xf32>
    %65 = tpu.matmul %37, %64, %cst_34 {dimension_numbers = #tpu.dot_dimension_numbers<[1], [0], [0], [1], [0, 0, 1, 1], [], []>} : vector<8x32xf32>, vector<32x32xf32>, vector<8x32xf32> -> vector<8x32xf32>
    %66 = arith.addf %63, %65 : vector<8x32xf32>
    %c0_35 = arith.constant 0 : index
    %c0_36 = arith.constant 0 : index
    %67 = vector.load %arg11[%c0_35, %c0_36] : memref<1x32xf32, #tpu.memory_space<vmem>>, vector<1x32xf32>
    %68 = vector.broadcast %67 : vector<1x32xf32> to vector<8x32xf32>
    %69 = arith.addf %66, %68 : vector<8x32xf32>
    %c0_37 = arith.constant 0 : index
    %c0_38 = arith.constant 0 : index
    %70 = vector.load %arg12[%c0_37, %c0_38] : memref<64x1xf32, #tpu.memory_space<vmem>>, vector<64x1xf32>
    %cst_39 = arith.constant dense<0.000000e+00> : vector<8x1xf32>
    %71 = tpu.matmul %61, %70, %cst_39 {dimension_numbers = #tpu.dot_dimension_numbers<[1], [0], [0], [1], [0, 0, 1, 1], [], []>} : vector<8x64xf32>, vector<64x1xf32>, vector<8x1xf32> -> vector<8x1xf32>
    %c0_40 = arith.constant 0 : index
    %c0_41 = arith.constant 0 : index
    %72 = vector.load %arg13[%c0_40, %c0_41] : memref<32x1xf32, #tpu.memory_space<vmem>>, vector<32x1xf32>
    %cst_42 = arith.constant dense<0.000000e+00> : vector<8x1xf32>
    %73 = tpu.matmul %37, %72, %cst_42 {dimension_numbers = #tpu.dot_dimension_numbers<[1], [0], [0], [1], [0, 0, 1, 1], [], []>} : vector<8x32xf32>, vector<32x1xf32>, vector<8x1xf32> -> vector<8x1xf32>
    %74 = arith.addf %71, %73 : vector<8x1xf32>
    %c0_43 = arith.constant 0 : index
    %c0_44 = arith.constant 0 : index
    %75 = vector.load %arg14[%c0_43, %c0_44] : memref<32x1xf32, #tpu.memory_space<vmem>>, vector<32x1xf32>
    %cst_45 = arith.constant dense<0.000000e+00> : vector<8x1xf32>
    %76 = tpu.matmul %0, %75, %cst_45 {dimension_numbers = #tpu.dot_dimension_numbers<[1], [0], [0], [1], [0, 0, 1, 1], [], []>} : vector<8x32xf32>, vector<32x1xf32>, vector<8x1xf32> -> vector<8x1xf32>
    %77 = arith.addf %74, %76 : vector<8x1xf32>
    %c0_46 = arith.constant 0 : index
    %c0_47 = arith.constant 0 : index
    %78 = vector.load %arg15[%c0_46, %c0_47] : memref<1x1xf32, #tpu.memory_space<vmem>>, vector<1x1xf32>
    %79 = vector.broadcast %78 : vector<1x1xf32> to vector<8x1xf32>
    %80 = arith.addf %77, %79 : vector<8x1xf32>
    %81 = arith.negf %80 : vector<8x1xf32>
    %82 = math.exp %81 : vector<8x1xf32>
    %cst_48 = arith.constant 1.000000e+00 : f32
    %83 = vector.broadcast %cst_48 : f32 to vector<8x1xf32>
    %84 = arith.addf %83, %82 : vector<8x1xf32>
    %85 = arith.divf %83, %84 : vector<8x1xf32>
    %c0_49 = arith.constant 0 : index
    %c0_50 = arith.constant 0 : index
    %86 = vector.load %arg16[%c0_49, %c0_50] : memref<8x32xf32, #tpu.memory_space<vmem>>, vector<8x32xf32>
    tpu.vector_store %arg16[%c0_49, %c0_50], %37 {strides = array<i32>} : memref<8x32xf32, #tpu.memory_space<vmem>>, vector<8x32xf32>,
    %c0_51 = arith.constant 0 : index
    %c0_52 = arith.constant 0 : index
    %87 = vector.load %arg17[%c0_51, %c0_52] : memref<8x64xf32, #tpu.memory_space<vmem>>, vector<8x64xf32>
    tpu.vector_store %arg17[%c0_51, %c0_52], %61 {strides = array<i32>} : memref<8x64xf32, #tpu.memory_space<vmem>>, vector<8x64xf32>,
    %c0_53 = arith.constant 0 : index
    %c0_54 = arith.constant 0 : index
    %88 = vector.load %arg18[%c0_53, %c0_54] : memref<8x16xf32, #tpu.memory_space<vmem>>, vector<8x16xf32>
    tpu.vector_store %arg18[%c0_53, %c0_54], %60 {strides = array<i32>} : memref<8x16xf32, #tpu.memory_space<vmem>>, vector<8x16xf32>,
    %c0_55 = arith.constant 0 : index
    %c0_56 = arith.constant 0 : index
    %89 = vector.load %arg19[%c0_55, %c0_56] : memref<8x1xf32, #tpu.memory_space<vmem>>, vector<8x1xf32>
    tpu.vector_store %arg19[%c0_55, %c0_56], %85 {strides = array<i32>} : memref<8x1xf32, #tpu.memory_space<vmem>>, vector<8x1xf32>,
    %90 = arith.truncf %69 : vector<8x32xf32> to vector<8x32xbf16>
    %c0_57 = arith.constant 0 : index
    %c0_58 = arith.constant 0 : index
    %91 = vector.load %arg20[%c0_57, %c0_58] : memref<8x32xbf16, #tpu.memory_space<vmem>>, vector<8x32xbf16>
    tpu.vector_store %arg20[%c0_57, %c0_58], %90 {strides = array<i32>} : memref<8x32xbf16, #tpu.memory_space<vmem>>, vector<8x32xbf16>,
    %cst_59 = arith.constant 1.000000e+00 : f32
    %92 = vector.broadcast %cst_59 : f32 to vector<8x1xf32>
    %93 = arith.subf %92, %85 : vector<8x1xf32>
    %94 = vector.broadcast %93 : vector<8x1xf32> to vector<8x16xf32>
    %95 = arith.mulf %94, %60 : vector<8x16xf32>
    %c0_60 = arith.constant 0 : index
    %c0_61 = arith.constant 0 : index
    %96 = vector.load %arg21[%c0_60, %c0_61] : memref<8x16xf32, #tpu.memory_space<vmem>>, vector<8x16xf32>
    tpu.vector_store %arg21[%c0_60, %c0_61], %95 {strides = array<i32>} : memref<8x16xf32, #tpu.memory_space<vmem>>, vector<8x16xf32>,
    return
  }
}

</mosaic_0001>

<llo_original>
// kernel: tpu_custom_call.1
$region0: #{tpu_custom_call.1}
  #allocation0 [shape = 'u32[]', space=smem, size = 0x4, offset = 0x4, fixed_abs, tag = 'smem constant byte address 0x4 - core index']
  #allocation1 [shape = 'u32[72,128]{1,0:T(1,128)}', space=vmem, size = 0x9000, scoped, tag = 'internal scratch']
  #allocation2 [shape = 'f32[1,1]{1,0:T(1,128)S(1)}', space=vmem, size = 0x200, scoped, tag = 'scoped memory for tpu_custom_call.1']
  %s0 = inlined_call_operand.hbm [shape: f32[8,32], index: 0, kind: input, shape index: {}]
  %s1 = inlined_call_operand.hbm [shape: f32[8,32], index: 1, kind: input, shape index: {}]
  %s2 = inlined_call_operand.vmem [shape: f32[8,16,64], index: 2, kind: input, shape index: {}]
  %s3 = inlined_call_operand.hbm [shape: f32[8,16], index: 3, kind: input, shape index: {}]
  %s4 = inlined_call_operand.vmem [shape: f32[32,96], index: 4, kind: input, shape index: {}]
  %s5 = inlined_call_operand.vmem [shape: f32[32,96], index: 5, kind: input, shape index: {}]
  %s6 = inlined_call_operand.vmem [shape: f32[1,96], index: 6, kind: input, shape index: {}]
  %s7 = inlined_call_operand.vmem [shape: f32[1,96], index: 7, kind: input, shape index: {}]
  %s8 = inlined_call_operand.hbm [shape: f32[32,64], index: 8, kind: input, shape index: {}]
  %s9 = inlined_call_operand.vmem [shape: f32[64,32], index: 9, kind: input, shape index: {}]
  %s10 = inlined_call_operand.hbm [shape: f32[32,32], index: 10, kind: input, shape index: {}]
  %s11 = inlined_call_operand.vmem [shape: f32[1,32], index: 11, kind: input, shape index: {}]
  %s12 = inlined_call_operand.vmem [shape: f32[64,1], index: 12, kind: input, shape index: {}]
  %s13 = inlined_call_operand.vmem [shape: f32[32,1], index: 13, kind: input, shape index: {}]
  %s14 = inlined_call_operand.vmem [shape: f32[32,1], index: 14, kind: input, shape index: {}]
  %s15 = inlined_call_operand.<no memory space> [shape: f32[1,1], index: 15, kind: input, shape index: {}]
  %s16 = inlined_call_operand.hbm [shape: f32[8,32], index: 16, kind: output, shape index: {0}]
  %s17 = inlined_call_operand.hbm [shape: f32[8,64], index: 17, kind: output, shape index: {1}]
  %s18 = inlined_call_operand.hbm [shape: f32[8,16], index: 18, kind: output, shape index: {2}]
  %s19 = inlined_call_operand.vmem [shape: f32[8,1], index: 19, kind: output, shape index: {3}]
  %s20 = inlined_call_operand.hbm [shape: bf16[8,32], index: 20, kind: output, shape index: {4}]
  %s21 = inlined_call_operand.hbm [shape: f32[8,16], index: 21, kind: output, shape index: {5}]
  %22 = xla_tuple %s16, %s17, %s18, %s19, %s20, %s21
  %s23 = sld [smem:[#allocation0]]
  $region134: #{tpu_custom_call.1} parent=0
    _
  %s25 = ssub.s32 1, %s23
  %s26 = scalar_select 0, %s25, %s23
  %v27 = vstv %s15
  %28 = vst [vmem:[#allocation2] sm:$0x1] %v27
  $region1: #{tpu_custom_call.1} parent=0
    #allocation3 [shape = 'u8[4096]{0}', space=vmem, size = 0x1000, scoped, tag = 'input window, operand 0, single buffered']
    #allocation4 [shape = 's32[1]{0}', space=sflag, size = 0x4, scoped, tag = 'scoped memory for tpu_custom_call.1']
    #allocation5 [shape = 's32[1]{0}', space=sflag, size = 0x4, scoped, tag = 'scoped memory for tpu_custom_call.1']
    #allocation6 [shape = 'u8[4096]{0}', space=vmem, size = 0x1000, scoped, tag = 'input window, operand 1, single buffered']
    #allocation7 [shape = 's32[1]{0}', space=sflag, size = 0x4, scoped, tag = 'scoped memory for tpu_custom_call.1']
    #allocation8 [shape = 'u8[4096]{0}', space=vmem, size = 0x1000, scoped, tag = 'input window, operand 3, single buffered']
    #allocation9 [shape = 'u8[16384]{0}', space=vmem, size = 0x4000, scoped, tag = 'input window, operand 8, single buffered']
    #allocation10 [shape = 's32[1]{0}', space=sflag, size = 0x4, scoped, tag = 'scoped memory for tpu_custom_call.1']
    #allocation11 [shape = 'u8[16384]{0}', space=vmem, size = 0x4000, scoped, tag = 'input window, operand 10, single buffered']
    #allocation12 [shape = 'u8[4096]{0}', space=vmem, size = 0x1000, scoped, tag = 'output window, operand 0, single buffered']
    #allocation13 [shape = 'u8[4096]{0}', space=vmem, size = 0x1000, scoped, tag = 'output window, operand 1, single buffered']
    #allocation14 [shape = 's32[1]{0}', space=sflag, size = 0x4, scoped, tag = 'scoped memory for tpu_custom_call.1']
    #allocation15 [shape = 'u8[4096]{0}', space=vmem, size = 0x1000, scoped, tag = 'output window, operand 2, single buffered']
    #allocation16 [shape = 'u8[2048]{0}', space=vmem, size = 0x800, scoped, tag = 'output window, operand 4, single buffered']
    #allocation17 [shape = 's32[1]{0}', space=sflag, size = 0x4, scoped, tag = 'scoped memory for tpu_custom_call.1']
    #allocation18 [shape = 'u8[4096]{0}', space=vmem, size = 0x1000, scoped, tag = 'output window, operand 5, single buffered']
    %29 = vsyncpa [#allocation4], 0
    %30 = vsyncpa [#allocation7], 0
    %31 = vsyncpa [#allocation10], 0
    %32 = vsyncpa [#allocation5], 0
    %33 = vsyncpa [#allocation14], 0
    %34 = vsyncpa [#allocation17], 0
    // Predicated region
    $region2: #{tpu_custom_call.1} parent=1 // pred_check
      _
    $region3: #{tpu_custom_call.1} parent=1 // pred_check_branch
      %36 = sbr.rel (0) target = $region5
    $region4: #{tpu_custom_call.1} parent=1 // pred_region
      %38 = vsyncadd [#allocation4], 0
      %s40 = sshll.u32 %s0, 4
      %s41 = int_to_ptr.hbm [resolvable:$true] %s40
      %s42 = sshll.u32 [#allocation3], 4
      %s43 = int_to_ptr.vmem [resolvable:$true] %s42
      %45 = dma.hbm_to_vmem [thread:$0]  %s41, 128, %s43, [#allocation4]
    $region5: #{tpu_custom_call.1} parent=1 // pred_fallthru
      _
    // Predicated region
    $region6: #{tpu_custom_call.1} parent=1 // pred_check
      _
    $region7: #{tpu_custom_call.1} parent=1 // pred_check_branch
      %47 = sbr.rel (0) target = $region9
    $region8: #{tpu_custom_call.1} parent=1 // pred_region
      %49 = vsyncadd [#allocation7], 0
      %s51 = sshll.u32 %s1, 4
      %s52 = int_to_ptr.hbm [resolvable:$true] %s51
      %s53 = sshll.u32 [#allocation6], 4
      %s54 = int_to_ptr.vmem [resolvable:$true] %s53
      %56 = dma.hbm_to_vmem [thread:$0]  %s52, 128, %s54, [#allocation7]
    $region9: #{tpu_custom_call.1} parent=1 // pred_fallthru
      _
    // Predicated region
    $region10: #{tpu_custom_call.1} parent=1 // pred_check
      _
    $region11: #{tpu_custom_call.1} parent=1 // pred_check_branch
      %58 = sbr.rel (0) target = $region13
    $region12: #{tpu_custom_call.1} parent=1 // pred_region
      _
    $region13: #{tpu_custom_call.1} parent=1 // pred_fallthru
      _
    // Predicated region
    $region14: #{tpu_custom_call.1} parent=1 // pred_check
      _
    $region15: #{tpu_custom_call.1} parent=1 // pred_check_branch
      %60 = sbr.rel (0) target = $region17
    $region16: #{tpu_custom_call.1} parent=1 // pred_region
      %62 = vsyncadd [#allocation7], 0
      %s64 = sshll.u32 %s3, 4
      %s65 = int_to_ptr.hbm [resolvable:$true] %s64
      %s66 = sshll.u32 [#allocation8], 4
      %s67 = int_to_ptr.vmem [resolvable:$true] %s66
      %69 = dma.hbm_to_vmem [thread:$0]  %s65, 128, %s67, [#allocation7]
    $region17: #{tpu_custom_call.1} parent=1 // pred_fallthru
      _
    // Predicated region
    $region18: #{tpu_custom_call.1} parent=1 // pred_check
      _
    $region19: #{tpu_custom_call.1} parent=1 // pred_check_branch
      %71 = sbr.rel (0) target = $region21
    $region20: #{tpu_custom_call.1} parent=1 // pred_region
      _
    $region21: #{tpu_custom_call.1} parent=1 // pred_fallthru
      _
    // Predicated region
    $region22: #{tpu_custom_call.1} parent=1 // pred_check
      _
    $region23: #{tpu_custom_call.1} parent=1 // pred_check_branch
      %73 = sbr.rel (0) target = $region25
    $region24: #{tpu_custom_call.1} parent=1 // pred_region
      _
    $region25: #{tpu_custom_call.1} parent=1 // pred_fallthru
      _
    // Predicated region
    $region26: #{tpu_custom_call.1} parent=1 // pred_check
      _
    $region27: #{tpu_custom_call.1} parent=1 // pred_check_branch
      %75 = sbr.rel (0) target = $region29
    $region28: #{tpu_custom_call.1} parent=1 // pred_region
      _
    $region29: #{tpu_custom_call.1} parent=1 // pred_fallthru
      _
    // Predicated region
    $region30: #{tpu_custom_call.1} parent=1 // pred_check
      _
    $region31: #{tpu_custom_call.1} parent=1 // pred_check_branch
      %77 = sbr.rel (0) target = $region33
    $region32: #{tpu_custom_call.1} parent=1 // pred_region
      _
    $region33: #{tpu_custom_call.1} parent=1 // pred_fallthru
      _
    // Predicated region
    $region34: #{tpu_custom_call.1} parent=1 // pred_check
      _
    $region35: #{tpu_custom_call.1} parent=1 // pred_check_branch
      %79 = sbr.rel (0) target = $region37
    $region36: #{tpu_custom_call.1} parent=1 // pred_region
      %81 = vsyncadd [#allocation10], 0
      %s82 = sshll.u32 %s8, 4
      %s83 = int_to_ptr.hbm [resolvable:$true] %s82
      %s84 = sshll.u32 [#allocation9], 4
      %s85 = int_to_ptr.vmem [resolvable:$true] %s84
      %90 = dma.hbm_to_vmem [thread:$0]  %s83, 512, %s85, [#allocation10], 128, 128, 8
    $region37: #{tpu_custom_call.1} parent=1 // pred_fallthru
      _
    // Predicated region
    $region38: #{tpu_custom_call.1} parent=1 // pred_check
      _
    $region39: #{tpu_custom_call.1} parent=1 // pred_check_branch
      %92 = sbr.rel (0) target = $region41
    $region40: #{tpu_custom_call.1} parent=1 // pred_region
      _
    $region41: #{tpu_custom_call.1} parent=1 // pred_fallthru
      _
    // Predicated region
    $region42: #{tpu_custom_call.1} parent=1 // pred_check
      _
    $region43: #{tpu_custom_call.1} parent=1 // pred_check_branch
      %94 = sbr.rel (0) target = $region45
    $region44: #{tpu_custom_call.1} parent=1 // pred_region
      %96 = vsyncadd [#allocation10], 0
      %s97 = sshll.u32 %s10, 4
      %s98 = int_to_ptr.hbm [resolvable:$true] %s97
      %s99 = sshll.u32 [#allocation11], 4
      %s100 = int_to_ptr.vmem [resolvable:$true] %s99
      %105 = dma.hbm_to_vmem [thread:$0]  %s98, 512, %s100, [#allocation10], 128, 128, 8
    $region45: #{tpu_custom_call.1} parent=1 // pred_fallthru
      _
    // Predicated region
    $region46: #{tpu_custom_call.1} parent=1 // pred_check
      _
    $region47: #{tpu_custom_call.1} parent=1 // pred_check_branch
      %107 = sbr.rel (0) target = $region49
    $region48: #{tpu_custom_call.1} parent=1 // pred_region
      _
    $region49: #{tpu_custom_call.1} parent=1 // pred_fallthru
      _
    // Predicated region
    $region50: #{tpu_custom_call.1} parent=1 // pred_check
      _
    $region51: #{tpu_custom_call.1} parent=1 // pred_check_branch
      %109 = sbr.rel (0) target = $region53
    $region52: #{tpu_custom_call.1} parent=1 // pred_region
      _
    $region53: #{tpu_custom_call.1} parent=1 // pred_fallthru
      _
    // Predicated region
    $region54: #{tpu_custom_call.1} parent=1 // pred_check
      _
    $region55: #{tpu_custom_call.1} parent=1 // pred_check_branch
      %111 = sbr.rel (0) target = $region57
    $region56: #{tpu_custom_call.1} parent=1 // pred_region
      _
    $region57: #{tpu_custom_call.1} parent=1 // pred_fallthru
      _
    // Predicated region
    $region58: #{tpu_custom_call.1} parent=1 // pred_check
      _
    $region59: #{tpu_custom_call.1} parent=1 // pred_check_branch
      %113 = sbr.rel (0) target = $region61
    $region60: #{tpu_custom_call.1} parent=1 // pred_region
      _
    $region61: #{tpu_custom_call.1} parent=1 // pred_fallthru
      _
    // Predicated region
    $region62: #{tpu_custom_call.1} parent=1 // pred_check
      _
    $region63: #{tpu_custom_call.1} parent=1 // pred_check_branch
      %115 = sbr.rel (0) target = $region65
    $region64: #{tpu_custom_call.1} parent=1 // pred_region
      _
    $region65: #{tpu_custom_call.1} parent=1 // pred_fallthru
      _
    // Predicated region
    $region66: #{tpu_custom_call.1} parent=1 // pred_check
      _
    $region67: #{tpu_custom_call.1} parent=1 // pred_check_branch
      %117 = sbr.rel (0) target = $region69
    $region68: #{tpu_custom_call.1} parent=1 // pred_region
      %119 = dma.done [#allocation4], 128
    $region69: #{tpu_custom_call.1} parent=1 // pred_fallthru
      _
    // Predicated region
    $region70: #{tpu_custom_call.1} parent=1 // pred_check
      _
    $region71: #{tpu_custom_call.1} parent=1 // pred_check_branch
      %121 = sbr.rel (0) target = $region73
    $region72: #{tpu_custom_call.1} parent=1 // pred_region
      %123 = dma.done [#allocation7], 128
    $region73: #{tpu_custom_call.1} parent=1 // pred_fallthru
      _
    // Predicated region
    $region74: #{tpu_custom_call.1} parent=1 // pred_check
      _
    $region75: #{tpu_custom_call.1} parent=1 // pred_check_branch
      %125 = sbr.rel (0) target = $region77
    $region76: #{tpu_custom_call.1} parent=1 // pred_region
      %127 = dma.done [#allocation7], 128
    $region77: #{tpu_custom_call.1} parent=1 // pred_fallthru
      _
    // Predicated region
    $region78: #{tpu_custom_call.1} parent=1 // pred_check
      _
    $region79: #{tpu_custom_call.1} parent=1 // pred_check_branch
      %129 = sbr.rel (0) target = $region81
    $region80: #{tpu_custom_call.1} parent=1 // pred_region
      %131 = dma.done [#allocation10], 512
    $region81: #{tpu_custom_call.1} parent=1 // pred_fallthru
      _
    // Predicated region
    $region82: #{tpu_custom_call.1} parent=1 // pred_check
      _
    $region83: #{tpu_custom_call.1} parent=1 // pred_check_branch
      %133 = sbr.rel (0) target = $region85
    $region84: #{tpu_custom_call.1} parent=1 // pred_region
      %135 = dma.done [#allocation10], 512
    $region85: #{tpu_custom_call.1} parent=1 // pred_fallthru
      _
    %v136 = vld [vmem:[#allocation3] sm:$0xff]
    %v137 = vld [vmem:[#allocation6] sm:$0xff]
    %v138 = vld [vmem:[%s4] sm:$0xff]
    %v139 = vld [vmem:[%s4 + $0x8] sm:$0xff]
    %v140 = vld [vmem:[%s4 + $0x10] sm:$0xff]
    %v141 = vld [vmem:[%s4 + $0x18] sm:$0xff]
    %v142 = vld [vmem:[%s6] sm:$0x1]
    %v144 = vperm.slane %v142, 0
    %vm146 = vcmask 261120
    %v148 = vsel %vm146, %v136, 0
    %150 = vmatpush.msra.mxu0 0.0
    %151 = vmatpush.msra.mxu0 0.0
    %152 = vmatpush.msra.mxu0 0.0
    %153 = vmatpush.msra.mxu0 0.0
    %154 = vmatpush.msra.mxu0 0.0
    %155 = vmatpush.msra.mxu0 0.0
    %156 = vmatpush.msra.mxu0 0.0
    %157 = vmatpush.msra.mxu0 0.0
    %158 = vmatpush.msra.mxu0 0.0
    %159 = vmatpush.msra.mxu0 0.0
    %160 = vmatpush.msra.mxu0 0.0
    %161 = vmatpush.msra.mxu0 0.0
    %162 = vmatpush.msra.mxu0 %v141
    %163 = vmatpush.msra.mxu0 %v140
    %164 = vmatpush.msra.mxu0 %v139
    %165 = vmatpush.msra.mxu0 %v138
    %166 = vmatmul.f32.gmra.mxu0 %v148
    %v167 = vpop.f32.mrf.mxu0
    %v168 = vadd.f32 %v144, %v167
    %169 = vdwg.mxu0
    %v170 = vld [vmem:[%s5] sm:$0xff]
    %v171 = vld [vmem:[%s5 + $0x8] sm:$0xff]
    %v172 = vld [vmem:[%s5 + $0x10] sm:$0xff]
    %v173 = vld [vmem:[%s5 + $0x18] sm:$0xff]
    %v174 = vld [vmem:[%s7] sm:$0x1]
    %v176 = vperm.slane %v174, 0
    %v179 = vsel %vm146, %v137, 0
    %181 = vmatpush.msra.mxu0 0.0
    %182 = vmatpush.msra.mxu0 0.0
    %183 = vmatpush.msra.mxu0 0.0
    %184 = vmatpush.msra.mxu0 0.0
    %185 = vmatpush.msra.mxu0 0.0
    %186 = vmatpush.msra.mxu0 0.0
    %187 = vmatpush.msra.mxu0 0.0
    %188 = vmatpush.msra.mxu0 0.0
    %189 = vmatpush.msra.mxu0 0.0
    %190 = vmatpush.msra.mxu0 0.0
    %191 = vmatpush.msra.mxu0 0.0
    %192 = vmatpush.msra.mxu0 0.0
    %193 = vmatpush.msra.mxu0 %v173
    %194 = vmatpush.msra.mxu0 %v172
    %195 = vmatpush.msra.mxu0 %v171
    %196 = vmatpush.msra.mxu0 %v170
    %197 = vmatmul.f32.gmra.mxu0 %v179
    %v198 = vpop.f32.mrf.mxu0
    %v199 = vadd.f32 %v176, %v198
    %200 = vdwg.mxu0
    %v201 = vadd.f32 %v168, %v199
    %v202 = vxor.u32 %v201, 2147483648
    %v203 = vmul.f32 %v202, 1.442695
    %v204 = vpow.pop %v203
    %v205 = vadd.f32 %v204, 1.0
    %v206 = vrcp.pop %v205
    %v207 = vmul.f32 %v205, %v206
    %v208 = vsub.f32 1.0, %v207
    %v209 = vmul.f32 %v206, %v208
    %v210 = vadd.f32 %v206, %v209
    %vm211 = vweird.f32 %v205
    %vm212 = vweird.f32 %v206
    %vm213 = vmor %vm211, %vm212
    %v214 = vsel %vm213, %v206, %v210
    %v215 = vand.u32 2147483647, %v205
    %vm216 = vcmp.eq.f32.partialorder %v215, 8.507059e+37
    %v217 = vand.u32 %v205, 2147483648
    %v218 = vor.u32 1.1754944e-38, %v217
    %v219 = vsel %vm216, %v218, %v214
    %v220 = vmul.f32 1.0, %v219
    %222 = vrot.lane.b32.xlu0 %v199, 64
    %v223 = vpop.permute.xlu0 %222
    %v225 = vmul.f32 %v220, %v223
    %227 = vrot.lane.b32.xlu0 %v225, 64
    %v228 = vpop.permute.xlu0 %227
    %v230 = vadd.f32 %v168, %v228
    %v231 = vtanh.pop %v230
    %v232 = vsub.f32 1.0, %v220
    %234 = vrot.lane.b32.xlu0 %v231, 96
    %v235 = vpop.permute.xlu0 %234
    %v237 = vmul.f32 %v232, %v235
    %238 = vrot.lane.b32.xlu0 %v137, 32
    %v239 = vpop.permute.xlu0 %238
    %v241 = vmul.f32 %v220, %v239
    %v242 = vadd.f32 %v237, %v241
    %v243 = vld [vmem:[%s2] sm:$0xff]
    %v244 = vld [vmem:[%s2 + $0x8] sm:$0xff]
    %v245 = vld [vmem:[%s2 + $0x10] sm:$0xff]
    %v246 = vld [vmem:[%s2 + $0x18] sm:$0xff]
    %v247 = vld [vmem:[%s2 + $0x20] sm:$0xff]
    %v248 = vld [vmem:[%s2 + $0x28] sm:$0xff]
    %v249 = vld [vmem:[%s2 + $0x30] sm:$0xff]
    %v250 = vld [vmem:[%s2 + $0x38] sm:$0xff]
    %v251 = vld [vmem:[%s2 + $0x40] sm:$0xff]
    %v252 = vld [vmem:[%s2 + $0x48] sm:$0xff]
    %v253 = vld [vmem:[%s2 + $0x50] sm:$0xff]
    %v254 = vld [vmem:[%s2 + $0x58] sm:$0xff]
    %v255 = vld [vmem:[%s2 + $0x60] sm:$0xff]
    %v256 = vld [vmem:[%s2 + $0x68] sm:$0xff]
    %v257 = vld [vmem:[%s2 + $0x70] sm:$0xff]
    %v258 = vld [vmem:[%s2 + $0x78] sm:$0xff]
    %v259 = vld [vmem:[#allocation9] sm:$0xff]
    %v260 = vld [vmem:[#allocation9 + $0x8] sm:$0xff]
    %v261 = vld [vmem:[#allocation9 + $0x10] sm:$0xff]
    %v262 = vld [vmem:[#allocation9 + $0x18] sm:$0xff]
    %264 = vrot.lane.b32.xlu0 %v242, 96
    %v265 = vpop.permute.xlu0 %264
    %v266 = vsel %vm146, %v265, 0
    %268 = vmatpush.msra.mxu0 0.0
    %269 = vmatpush.msra.mxu0 0.0
    %270 = vmatpush.msra.mxu0 0.0
    %271 = vmatpush.msra.mxu0 0.0
    %272 = vmatpush.msra.mxu0 0.0
    %273 = vmatpush.msra.mxu0 0.0
    %274 = vmatpush.msra.mxu0 0.0
    %275 = vmatpush.msra.mxu0 0.0
    %276 = vmatpush.msra.mxu0 0.0
    %277 = vmatpush.msra.mxu0 0.0
    %278 = vmatpush.msra.mxu0 0.0
    %279 = vmatpush.msra.mxu0 0.0
    %280 = vmatpush.msra.mxu0 %v262
    %281 = vmatpush.msra.mxu0 %v261
    %282 = vmatpush.msra.mxu0 %v260
    %283 = vmatpush.msra.mxu0 %v259
    %284 = vmatmul.f32.gmra.mxu0 %v266
    %v285 = vpop.f32.mrf.mxu0
    %v286 = vadd.f32 0.0, %v285
    %287 = vdwg.mxu0
    %v289 = vrot.slane %v286, 1
    %v290 = vrot.slane %v286, 2
    %v291 = vrot.slane %v286, 3
    %v292 = vrot.slane %v286, 4
    %v293 = vrot.slane %v286, 5
    %v294 = vrot.slane %v286, 6
    %v295 = vrot.slane %v286, 7
    %vm296 = vcmask 523264
    %v297 = vsel %vm296, %v286, 0
    %v300 = vsel %vm296, %v243, 0
    %v303 = vsel %vm296, %v244, 0
    %305 = vmatpush.xpose.msra.mxu0 0.0
    %306 = vmatpush.xpose.msra.mxu0 0.0
    %307 = vmatpush.xpose.msra.mxu0 0.0
    %308 = vmatpush.xpose.msra.mxu0 0.0
    %309 = vmatpush.xpose.msra.mxu0 0.0
    %310 = vmatpush.xpose.msra.mxu0 0.0
    %311 = vmatpush.xpose.msra.mxu0 0.0
    %312 = vmatpush.xpose.msra.mxu0 0.0
    %313 = vmatpush.xpose.msra.mxu0 0.0
    %314 = vmatpush.xpose.msra.mxu0 0.0
    %315 = vmatpush.xpose.msra.mxu0 0.0
    %316 = vmatpush.xpose.msra.mxu0 0.0
    %317 = vmatpush.xpose.msra.mxu0 0.0
    %318 = vmatpush.xpose.msra.mxu0 0.0
    %319 = vmatpush.xpose.msra.mxu0 %v303
    %320 = vmatpush.xpose.msra.mxu0 %v300
    %321 = vmatmul.f32.gmra.mxu0 %v297
    %v322 = vpop.f32.mrf.mxu0
    %v323 = vadd.f32 0.0, %v322
    %324 = vdwg.mxu0
    %v325 = vsel %vm296, %v289, 0
    %v328 = vsel %vm296, %v245, 0
    %v331 = vsel %vm296, %v246, 0
    %333 = vmatpush.xpose.msra.mxu0 0.0
    %334 = vmatpush.xpose.msra.mxu0 0.0
    %335 = vmatpush.xpose.msra.mxu0 0.0
    %336 = vmatpush.xpose.msra.mxu0 0.0
    %337 = vmatpush.xpose.msra.mxu0 0.0
    %338 = vmatpush.xpose.msra.mxu0 0.0
    %339 = vmatpush.xpose.msra.mxu0 0.0
    %340 = vmatpush.xpose.msra.mxu0 0.0
    %341 = vmatpush.xpose.msra.mxu0 0.0
    %342 = vmatpush.xpose.msra.mxu0 0.0
    %343 = vmatpush.xpose.msra.mxu0 0.0
    %344 = vmatpush.xpose.msra.mxu0 0.0
    %345 = vmatpush.xpose.msra.mxu0 0.0
    %346 = vmatpush.xpose.msra.mxu0 0.0
    %347 = vmatpush.xpose.msra.mxu0 %v331
    %348 = vmatpush.xpose.msra.mxu0 %v328
    %349 = vmatmul.f32.gmra.mxu0 %v325
    %v350 = vpop.f32.mrf.mxu0
    %v351 = vadd.f32 0.0, %v350
    %352 = vdwg.mxu0
    %v353 = vsel %vm296, %v290, 0
    %v356 = vsel %vm296, %v247, 0
    %v359 = vsel %vm296, %v248, 0
    %361 = vmatpush.xpose.msra.mxu0 0.0
    %362 = vmatpush.xpose.msra.mxu0 0.0
    %363 = vmatpush.xpose.msra.mxu0 0.0
    %364 = vmatpush.xpose.msra.mxu0 0.0
    %365 = vmatpush.xpose.msra.mxu0 0.0
    %366 = vmatpush.xpose.msra.mxu0 0.0
    %367 = vmatpush.xpose.msra.mxu0 0.0
    %368 = vmatpush.xpose.msra.mxu0 0.0
    %369 = vmatpush.xpose.msra.mxu0 0.0
    %370 = vmatpush.xpose.msra.mxu0 0.0
    %371 = vmatpush.xpose.msra.mxu0 0.0
    %372 = vmatpush.xpose.msra.mxu0 0.0
    %373 = vmatpush.xpose.msra.mxu0 0.0
    %374 = vmatpush.xpose.msra.mxu0 0.0
    %375 = vmatpush.xpose.msra.mxu0 %v359
    %376 = vmatpush.xpose.msra.mxu0 %v356
    %377 = vmatmul.f32.gmra.mxu0 %v353
    %v378 = vpop.f32.mrf.mxu0
    %v379 = vadd.f32 0.0, %v378
    %380 = vdwg.mxu0
    %v381 = vsel %vm296, %v291, 0
    %v384 = vsel %vm296, %v249, 0
    %v387 = vsel %vm296, %v250, 0
    %389 = vmatpush.xpose.msra.mxu0 0.0
    %390 = vmatpush.xpose.msra.mxu0 0.0
    %391 = vmatpush.xpose.msra.mxu0 0.0
    %392 = vmatpush.xpose.msra.mxu0 0.0
    %393 = vmatpush.xpose.msra.mxu0 0.0
    %394 = vmatpush.xpose.msra.mxu0 0.0
    %395 = vmatpush.xpose.msra.mxu0 0.0
    %396 = vmatpush.xpose.msra.mxu0 0.0
    %397 = vmatpush.xpose.msra.mxu0 0.0
    %398 = vmatpush.xpose.msra.mxu0 0.0
    %399 = vmatpush.xpose.msra.mxu0 0.0
    %400 = vmatpush.xpose.msra.mxu0 0.0
    %401 = vmatpush.xpose.msra.mxu0 0.0
    %402 = vmatpush.xpose.msra.mxu0 0.0
    %403 = vmatpush.xpose.msra.mxu0 %v387
    %404 = vmatpush.xpose.msra.mxu0 %v384
    %405 = vmatmul.f32.gmra.mxu0 %v381
    %v406 = vpop.f32.mrf.mxu0
    %v407 = vadd.f32 0.0, %v406
    %408 = vdwg.mxu0
    %v409 = vsel %vm296, %v292, 0
    %v412 = vsel %vm296, %v251, 0
    %v415 = vsel %vm296, %v252, 0
    %417 = vmatpush.xpose.msra.mxu0 0.0
    %418 = vmatpush.xpose.msra.mxu0 0.0
    %419 = vmatpush.xpose.msra.mxu0 0.0
    %420 = vmatpush.xpose.msra.mxu0 0.0
    %421 = vmatpush.xpose.msra.mxu0 0.0
    %422 = vmatpush.xpose.msra.mxu0 0.0
    %423 = vmatpush.xpose.msra.mxu0 0.0
    %424 = vmatpush.xpose.msra.mxu0 0.0
    %425 = vmatpush.xpose.msra.mxu0 0.0
    %426 = vmatpush.xpose.msra.mxu0 0.0
    %427 = vmatpush.xpose.msra.mxu0 0.0
    %428 = vmatpush.xpose.msra.mxu0 0.0
    %429 = vmatpush.xpose.msra.mxu0 0.0
    %430 = vmatpush.xpose.msra.mxu0 0.0
    %431 = vmatpush.xpose.msra.mxu0 %v415
    %432 = vmatpush.xpose.msra.mxu0 %v412
    %433 = vmatmul.f32.gmra.mxu0 %v409
    %v434 = vpop.f32.mrf.mxu0
    %v435 = vadd.f32 0.0, %v434
    %436 = vdwg.mxu0
    %v437 = vsel %vm296, %v293, 0
    %v440 = vsel %vm296, %v253, 0
    %v443 = vsel %vm296, %v254, 0
    %445 = vmatpush.xpose.msra.mxu0 0.0
    %446 = vmatpush.xpose.msra.mxu0 0.0
    %447 = vmatpush.xpose.msra.mxu0 0.0
    %448 = vmatpush.xpose.msra.mxu0 0.0
    %449 = vmatpush.xpose.msra.mxu0 0.0
    %450 = vmatpush.xpose.msra.mxu0 0.0
    %451 = vmatpush.xpose.msra.mxu0 0.0
    %452 = vmatpush.xpose.msra.mxu0 0.0
    %453 = vmatpush.xpose.msra.mxu0 0.0
    %454 = vmatpush.xpose.msra.mxu0 0.0
    %455 = vmatpush.xpose.msra.mxu0 0.0
    %456 = vmatpush.xpose.msra.mxu0 0.0
    %457 = vmatpush.xpose.msra.mxu0 0.0
    %458 = vmatpush.xpose.msra.mxu0 0.0
    %459 = vmatpush.xpose.msra.mxu0 %v443
    %460 = vmatpush.xpose.msra.mxu0 %v440
    %461 = vmatmul.f32.gmra.mxu0 %v437
    %v462 = vpop.f32.mrf.mxu0
    %v463 = vadd.f32 0.0, %v462
    %464 = vdwg.mxu0
    %v465 = vsel %vm296, %v294, 0
    %v468 = vsel %vm296, %v255, 0
    %v471 = vsel %vm296, %v256, 0
    %473 = vmatpush.xpose.msra.mxu0 0.0
    %474 = vmatpush.xpose.msra.mxu0 0.0
    %475 = vmatpush.xpose.msra.mxu0 0.0
    %476 = vmatpush.xpose.msra.mxu0 0.0
    %477 = vmatpush.xpose.msra.mxu0 0.0
    %478 = vmatpush.xpose.msra.mxu0 0.0
    %479 = vmatpush.xpose.msra.mxu0 0.0
    %480 = vmatpush.xpose.msra.mxu0 0.0
    %481 = vmatpush.xpose.msra.mxu0 0.0
    %482 = vmatpush.xpose.msra.mxu0 0.0
    %483 = vmatpush.xpose.msra.mxu0 0.0
    %484 = vmatpush.xpose.msra.mxu0 0.0
    %485 = vmatpush.xpose.msra.mxu0 0.0
    %486 = vmatpush.xpose.msra.mxu0 0.0
    %487 = vmatpush.xpose.msra.mxu0 %v471
    %488 = vmatpush.xpose.msra.mxu0 %v468
    %489 = vmatmul.f32.gmra.mxu0 %v465
    %v490 = vpop.f32.mrf.mxu0
    %v491 = vadd.f32 0.0, %v490
    %492 = vdwg.mxu0
    %v493 = vsel %vm296, %v295, 0
    %v496 = vsel %vm296, %v257, 0
    %v499 = vsel %vm296, %v258, 0
    %501 = vmatpush.xpose.msra.mxu0 0.0
    %502 = vmatpush.xpose.msra.mxu0 0.0
    %503 = vmatpush.xpose.msra.mxu0 0.0
    %504 = vmatpush.xpose.msra.mxu0 0.0
    %505 = vmatpush.xpose.msra.mxu0 0.0
    %506 = vmatpush.xpose.msra.mxu0 0.0
    %507 = vmatpush.xpose.msra.mxu0 0.0
    %508 = vmatpush.xpose.msra.mxu0 0.0
    %509 = vmatpush.xpose.msra.mxu0 0.0
    %510 = vmatpush.xpose.msra.mxu0 0.0
    %511 = vmatpush.xpose.msra.mxu0 0.0
    %512 = vmatpush.xpose.msra.mxu0 0.0
    %513 = vmatpush.xpose.msra.mxu0 0.0
    %514 = vmatpush.xpose.msra.mxu0 0.0
    %515 = vmatpush.xpose.msra.mxu0 %v499
    %516 = vmatpush.xpose.msra.mxu0 %v496
    %517 = vmatmul.f32.gmra.mxu0 %v493
    %v518 = vpop.f32.mrf.mxu0
    %v519 = vadd.f32 0.0, %v518
    %520 = vdwg.mxu0
    %vm521 = vcmask 122880
    %v522 = vsel %vm521, %v323, -inf
    %523 = vmax.xlane.f32.xlu0 %v522
    %v524 = vpop.xlane.xlu0 %523
    %v525 = vsel %vm521, %v351, -inf
    %526 = vmax.xlane.f32.xlu0 %v525
    %v527 = vpop.xlane.xlu0 %526
    %v528 = vsel %vm521, %v379, -inf
    %529 = vmax.xlane.f32.xlu0 %v528
    %v530 = vpop.xlane.xlu0 %529
    %v531 = vsel %vm521, %v407, -inf
    %532 = vmax.xlane.f32.xlu0 %v531
    %v533 = vpop.xlane.xlu0 %532
    %v534 = vsel %vm521, %v435, -inf
    %535 = vmax.xlane.f32.xlu0 %v534
    %v536 = vpop.xlane.xlu0 %535
    %v537 = vsel %vm521, %v463, -inf
    %538 = vmax.xlane.f32.xlu0 %v537
    %v539 = vpop.xlane.xlu0 %538
    %v540 = vsel %vm521, %v491, -inf
    %541 = vmax.xlane.f32.xlu0 %v540
    %v542 = vpop.xlane.xlu0 %541
    %v543 = vsel %vm521, %v519, -inf
    %544 = vmax.xlane.f32.xlu0 %v543
    %v545 = vpop.xlane.xlu0 %544
    %v546 = vsub.f32 %v323, %v524
    %v547 = vsub.f32 %v351, %v527
    %v548 = vsub.f32 %v379, %v530
    %v549 = vsub.f32 %v407, %v533
    %v550 = vsub.f32 %v435, %v536
    %v551 = vsub.f32 %v463, %v539
    %v552 = vsub.f32 %v491, %v542
    %v553 = vsub.f32 %v519, %v545
    %v554 = vmul.f32 %v546, 1.442695
    %v555 = vpow.pop %v554
    %v556 = vmul.f32 %v547, 1.442695
    %v557 = vpow.pop %v556
    %v558 = vmul.f32 %v548, 1.442695
    %v559 = vpow.pop %v558
    %v560 = vmul.f32 %v549, 1.442695
    %v561 = vpow.pop %v560
    %v562 = vmul.f32 %v550, 1.442695
    %v563 = vpow.pop %v562
    %v564 = vmul.f32 %v551, 1.442695
    %v565 = vpow.pop %v564
    %v566 = vmul.f32 %v552, 1.442695
    %v567 = vpow.pop %v566
    %v568 = vmul.f32 %v553, 1.442695
    %v569 = vpow.pop %v568
    %v570 = vld [vmem:[#allocation8] sm:$0xff]
    %v572 = vrot.slane %v570, 1
    %v573 = vrot.slane %v570, 2
    %v574 = vrot.slane %v570, 3
    %v575 = vrot.slane %v570, 4
    %v576 = vrot.slane %v570, 5
    %v577 = vrot.slane %v570, 6
    %v578 = vrot.slane %v570, 7
    %v586 = vmul.f32 %v555, %v570
    %v587 = vmul.f32 %v557, %v572
    %v588 = vmul.f32 %v559, %v573
    %v589 = vmul.f32 %v561, %v574
    %v590 = vmul.f32 %v563, %v575
    %v591 = vmul.f32 %v565, %v576
    %v592 = vmul.f32 %v567, %v577
    %v593 = vmul.f32 %v569, %v578
    %v594 = vsel %vm521, %v586, 0.0
    %595 = vadd.xlane.f32.xlu0 %v594
    %v596 = vpop.xlane.xlu0 %595
    %v597 = vsel %vm521, %v587, 0.0
    %598 = vadd.xlane.f32.xlu0 %v597
    %v599 = vpop.xlane.xlu0 %598
    %v600 = vsel %vm521, %v588, 0.0
    %601 = vadd.xlane.f32.xlu0 %v600
    %v602 = vpop.xlane.xlu0 %601
    %v603 = vsel %vm521, %v589, 0.0
    %604 = vadd.xlane.f32.xlu0 %v603
    %v605 = vpop.xlane.xlu0 %604
    %v606 = vsel %vm521, %v590, 0.0
    %607 = vadd.xlane.f32.xlu0 %v606
    %v608 = vpop.xlane.xlu0 %607
    %v609 = vsel %vm521, %v591, 0.0
    %610 = vadd.xlane.f32.xlu0 %v609
    %v611 = vpop.xlane.xlu0 %610
    %v612 = vsel %vm521, %v592, 0.0
    %613 = vadd.xlane.f32.xlu0 %v612
    %v614 = vpop.xlane.xlu0 %613
    %v615 = vsel %vm521, %v593, 0.0
    %616 = vadd.xlane.f32.xlu0 %v615
    %v617 = vpop.xlane.xlu0 %616
    %v618 = vmax.f32 %v596, 1e-30
    %v619 = vmax.f32 %v599, 1e-30
    %v620 = vmax.f32 %v602, 1e-30
    %v621 = vmax.f32 %v605, 1e-30
    %v622 = vmax.f32 %v608, 1e-30
    %v623 = vmax.f32 %v611, 1e-30
    %v624 = vmax.f32 %v614, 1e-30
    %v625 = vmax.f32 %v617, 1e-30
    %v626 = vrcp.pop %v618
    %v627 = vmul.f32 %v618, %v626
    %v628 = vsub.f32 1.0, %v627
    %v629 = vmul.f32 %v626, %v628
    %v630 = vadd.f32 %v626, %v629
    %vm631 = vweird.f32 %v618
    %vm632 = vweird.f32 %v626
    %vm633 = vmor %vm631, %vm632
    %v634 = vsel %vm633, %v626, %v630
    %v635 = vand.u32 2147483647, %v618
    %vm636 = vcmp.eq.f32.partialorder %v635, 8.507059e+37
    %v637 = vand.u32 %v618, 2147483648
    %v638 = vor.u32 1.1754944e-38, %v637
    %v639 = vsel %vm636, %v638, %v634
    %v640 = vmul.f32 1.0, %v639
    %v641 = vrcp.pop %v619
    %v642 = vmul.f32 %v619, %v641
    %v643 = vsub.f32 1.0, %v642
    %v644 = vmul.f32 %v641, %v643
    %v645 = vadd.f32 %v641, %v644
    %vm646 = vweird.f32 %v619
    %vm647 = vweird.f32 %v641
    %vm648 = vmor %vm646, %vm647
    %v649 = vsel %vm648, %v641, %v645
    %v650 = vand.u32 2147483647, %v619
    %vm651 = vcmp.eq.f32.partialorder %v650, 8.507059e+37
    %v652 = vand.u32 %v619, 2147483648
    %v653 = vor.u32 1.1754944e-38, %v652
    %v654 = vsel %vm651, %v653, %v649
    %v655 = vmul.f32 1.0, %v654
    %v656 = vrcp.pop %v620
    %v657 = vmul.f32 %v620, %v656
    %v658 = vsub.f32 1.0, %v657
    %v659 = vmul.f32 %v656, %v658
    %v660 = vadd.f32 %v656, %v659
    %vm661 = vweird.f32 %v620
    %vm662 = vweird.f32 %v656
    %vm663 = vmor %vm661, %vm662
    %v664 = vsel %vm663, %v656, %v660
    %v665 = vand.u32 2147483647, %v620
    %vm666 = vcmp.eq.f32.partialorder %v665, 8.507059e+37
    %v667 = vand.u32 %v620, 2147483648
    %v668 = vor.u32 1.1754944e-38, %v667
    %v669 = vsel %vm666, %v668, %v664
    %v670 = vmul.f32 1.0, %v669
    %v671 = vrcp.pop %v621
    %v672 = vmul.f32 %v621, %v671
    %v673 = vsub.f32 1.0, %v672
    %v674 = vmul.f32 %v671, %v673
    %v675 = vadd.f32 %v671, %v674
    %vm676 = vweird.f32 %v621
    %vm677 = vweird.f32 %v671
    %vm678 = vmor %vm676, %vm677
    %v679 = vsel %vm678, %v671, %v675
    %v680 = vand.u32 2147483647, %v621
    %vm681 = vcmp.eq.f32.partialorder %v680, 8.507059e+37
    %v682 = vand.u32 %v621, 2147483648
    %v683 = vor.u32 1.1754944e-38, %v682
    %v684 = vsel %vm681, %v683, %v679
    %v685 = vmul.f32 1.0, %v684
    %v686 = vrcp.pop %v622
    %v687 = vmul.f32 %v622, %v686
    %v688 = vsub.f32 1.0, %v687
    %v689 = vmul.f32 %v686, %v688
    %v690 = vadd.f32 %v686, %v689
    %vm691 = vweird.f32 %v622
    %vm692 = vweird.f32 %v686
    %vm693 = vmor %vm691, %vm692
    %v694 = vsel %vm693, %v686, %v690
    %v695 = vand.u32 2147483647, %v622
    %vm696 = vcmp.eq.f32.partialorder %v695, 8.507059e+37
    %v697 = vand.u32 %v622, 2147483648
    %v698 = vor.u32 1.1754944e-38, %v697
    %v699 = vsel %vm696, %v698, %v694
    %v700 = vmul.f32 1.0, %v699
    %v701 = vrcp.pop %v623
    %v702 = vmul.f32 %v623, %v701
    %v703 = vsub.f32 1.0, %v702
    %v704 = vmul.f32 %v701, %v703
    %v705 = vadd.f32 %v701, %v704
    %vm706 = vweird.f32 %v623
    %vm707 = vweird.f32 %v701
    %vm708 = vmor %vm706, %vm707
    %v709 = vsel %vm708, %v701, %v705
    %v710 = vand.u32 2147483647, %v623
    %vm711 = vcmp.eq.f32.partialorder %v710, 8.507059e+37
    %v712 = vand.u32 %v623, 2147483648
    %v713 = vor.u32 1.1754944e-38, %v712
    %v714 = vsel %vm711, %v713, %v709
    %v715 = vmul.f32 1.0, %v714
    %v716 = vrcp.pop %v624
    %v717 = vmul.f32 %v624, %v716
    %v718 = vsub.f32 1.0, %v717
    %v719 = vmul.f32 %v716, %v718
    %v720 = vadd.f32 %v716, %v719
    %vm721 = vweird.f32 %v624
    %vm722 = vweird.f32 %v716
    %vm723 = vmor %vm721, %vm722
    %v724 = vsel %vm723, %v716, %v720
    %v725 = vand.u32 2147483647, %v624
    %vm726 = vcmp.eq.f32.partialorder %v725, 8.507059e+37
    %v727 = vand.u32 %v624, 2147483648
    %v728 = vor.u32 1.1754944e-38, %v727
    %v729 = vsel %vm726, %v728, %v724
    %v730 = vmul.f32 1.0, %v729
    %v731 = vrcp.pop %v625
    %v732 = vmul.f32 %v625, %v731
    %v733 = vsub.f32 1.0, %v732
    %v734 = vmul.f32 %v731, %v733
    %v735 = vadd.f32 %v731, %v734
    %vm736 = vweird.f32 %v625
    %vm737 = vweird.f32 %v731
    %vm738 = vmor %vm736, %vm737
    %v739 = vsel %vm738, %v731, %v735
    %v740 = vand.u32 2147483647, %v625
    %vm741 = vcmp.eq.f32.partialorder %v740, 8.507059e+37
    %v742 = vand.u32 %v625, 2147483648
    %v743 = vor.u32 1.1754944e-38, %v742
    %v744 = vsel %vm741, %v743, %v739
    %v745 = vmul.f32 1.0, %v744
    %v746 = vmul.f32 %v586, %v640
    %v747 = vmul.f32 %v587, %v655
    %v748 = vmul.f32 %v588, %v670
    %v749 = vmul.f32 %v589, %v685
    %v750 = vmul.f32 %v590, %v700
    %v751 = vmul.f32 %v591, %v715
    %v752 = vmul.f32 %v592, %v730
    %v753 = vmul.f32 %v593, %v745
    %vm754 = vcmask 130048
    %v756 = vsel %vm754, %v746, 0
    %758 = vmatpush.msra.mxu0 0.0
    %759 = vmatpush.msra.mxu0 0.0
    %760 = vmatpush.msra.mxu0 0.0
    %761 = vmatpush.msra.mxu0 0.0
    %762 = vmatpush.msra.mxu0 0.0
    %763 = vmatpush.msra.mxu0 0.0
    %764 = vmatpush.msra.mxu0 0.0
    %765 = vmatpush.msra.mxu0 0.0
    %766 = vmatpush.msra.mxu0 0.0
    %767 = vmatpush.msra.mxu0 0.0
    %768 = vmatpush.msra.mxu0 0.0
    %769 = vmatpush.msra.mxu0 0.0
    %770 = vmatpush.msra.mxu0 0.0
    %771 = vmatpush.msra.mxu0 0.0
    %772 = vmatpush.msra.mxu0 %v244
    %773 = vmatpush.msra.mxu0 %v243
    %774 = vmatmul.f32.gmra.mxu0 %v756
    %v775 = vpop.f32.mrf.mxu0
    %v776 = vadd.f32 0.0, %v775
    %777 = vdwg.mxu0
    %v779 = vsel %vm754, %v747, 0
    %781 = vmatpush.msra.mxu0 0.0
    %782 = vmatpush.msra.mxu0 0.0
    %783 = vmatpush.msra.mxu0 0.0
    %784 = vmatpush.msra.mxu0 0.0
    %785 = vmatpush.msra.mxu0 0.0
    %786 = vmatpush.msra.mxu0 0.0
    %787 = vmatpush.msra.mxu0 0.0
    %788 = vmatpush.msra.mxu0 0.0
    %789 = vmatpush.msra.mxu0 0.0
    %790 = vmatpush.msra.mxu0 0.0
    %791 = vmatpush.msra.mxu0 0.0
    %792 = vmatpush.msra.mxu0 0.0
    %793 = vmatpush.msra.mxu0 0.0
    %794 = vmatpush.msra.mxu0 0.0
    %795 = vmatpush.msra.mxu0 %v246
    %796 = vmatpush.msra.mxu0 %v245
    %797 = vmatmul.f32.gmra.mxu0 %v779
    %v798 = vpop.f32.mrf.mxu0
    %v799 = vadd.f32 0.0, %v798
    %800 = vdwg.mxu0
    %v802 = vsel %vm754, %v748, 0
    %804 = vmatpush.msra.mxu0 0.0
    %805 = vmatpush.msra.mxu0 0.0
    %806 = vmatpush.msra.mxu0 0.0
    %807 = vmatpush.msra.mxu0 0.0
    %808 = vmatpush.msra.mxu0 0.0
    %809 = vmatpush.msra.mxu0 0.0
    %810 = vmatpush.msra.mxu0 0.0
    %811 = vmatpush.msra.mxu0 0.0
    %812 = vmatpush.msra.mxu0 0.0
    %813 = vmatpush.msra.mxu0 0.0
    %814 = vmatpush.msra.mxu0 0.0
    %815 = vmatpush.msra.mxu0 0.0
    %816 = vmatpush.msra.mxu0 0.0
    %817 = vmatpush.msra.mxu0 0.0
    %818 = vmatpush.msra.mxu0 %v248
    %819 = vmatpush.msra.mxu0 %v247
    %820 = vmatmul.f32.gmra.mxu0 %v802
    %v821 = vpop.f32.mrf.mxu0
    %v822 = vadd.f32 0.0, %v821
    %823 = vdwg.mxu0
    %v825 = vsel %vm754, %v749, 0
    %827 = vmatpush.msra.mxu0 0.0
    %828 = vmatpush.msra.mxu0 0.0
    %829 = vmatpush.msra.mxu0 0.0
    %830 = vmatpush.msra.mxu0 0.0
    %831 = vmatpush.msra.mxu0 0.0
    %832 = vmatpush.msra.mxu0 0.0
    %833 = vmatpush.msra.mxu0 0.0
    %834 = vmatpush.msra.mxu0 0.0
    %835 = vmatpush.msra.mxu0 0.0
    %836 = vmatpush.msra.mxu0 0.0
    %837 = vmatpush.msra.mxu0 0.0
    %838 = vmatpush.msra.mxu0 0.0
    %839 = vmatpush.msra.mxu0 0.0
    %840 = vmatpush.msra.mxu0 0.0
    %841 = vmatpush.msra.mxu0 %v250
    %842 = vmatpush.msra.mxu0 %v249
    %843 = vmatmul.f32.gmra.mxu0 %v825
    %v844 = vpop.f32.mrf.mxu0
    %v845 = vadd.f32 0.0, %v844
    %846 = vdwg.mxu0
    %v848 = vsel %vm754, %v750, 0
    %850 = vmatpush.msra.mxu0 0.0
    %851 = vmatpush.msra.mxu0 0.0
    %852 = vmatpush.msra.mxu0 0.0
    %853 = vmatpush.msra.mxu0 0.0
    %854 = vmatpush.msra.mxu0 0.0
    %855 = vmatpush.msra.mxu0 0.0
    %856 = vmatpush.msra.mxu0 0.0
    %857 = vmatpush.msra.mxu0 0.0
    %858 = vmatpush.msra.mxu0 0.0
    %859 = vmatpush.msra.mxu0 0.0
    %860 = vmatpush.msra.mxu0 0.0
    %861 = vmatpush.msra.mxu0 0.0
    %862 = vmatpush.msra.mxu0 0.0
    %863 = vmatpush.msra.mxu0 0.0
    %864 = vmatpush.msra.mxu0 %v252
    %865 = vmatpush.msra.mxu0 %v251
    %866 = vmatmul.f32.gmra.mxu0 %v848
    %v867 = vpop.f32.mrf.mxu0
    %v868 = vadd.f32 0.0, %v867
    %869 = vdwg.mxu0
    %v871 = vsel %vm754, %v751, 0
    %873 = vmatpush.msra.mxu0 0.0
    %874 = vmatpush.msra.mxu0 0.0
    %875 = vmatpush.msra.mxu0 0.0
    %876 = vmatpush.msra.mxu0 0.0
    %877 = vmatpush.msra.mxu0 0.0
    %878 = vmatpush.msra.mxu0 0.0
    %879 = vmatpush.msra.mxu0 0.0
    %880 = vmatpush.msra.mxu0 0.0
    %881 = vmatpush.msra.mxu0 0.0
    %882 = vmatpush.msra.mxu0 0.0
    %883 = vmatpush.msra.mxu0 0.0
    %884 = vmatpush.msra.mxu0 0.0
    %885 = vmatpush.msra.mxu0 0.0
    %886 = vmatpush.msra.mxu0 0.0
    %887 = vmatpush.msra.mxu0 %v254
    %888 = vmatpush.msra.mxu0 %v253
    %889 = vmatmul.f32.gmra.mxu0 %v871
    %v890 = vpop.f32.mrf.mxu0
    %v891 = vadd.f32 0.0, %v890
    %892 = vdwg.mxu0
    %v894 = vsel %vm754, %v752, 0
    %896 = vmatpush.msra.mxu0 0.0
    %897 = vmatpush.msra.mxu0 0.0
    %898 = vmatpush.msra.mxu0 0.0
    %899 = vmatpush.msra.mxu0 0.0
    %900 = vmatpush.msra.mxu0 0.0
    %901 = vmatpush.msra.mxu0 0.0
    %902 = vmatpush.msra.mxu0 0.0
    %903 = vmatpush.msra.mxu0 0.0
    %904 = vmatpush.msra.mxu0 0.0
    %905 = vmatpush.msra.mxu0 0.0
    %906 = vmatpush.msra.mxu0 0.0
    %907 = vmatpush.msra.mxu0 0.0
    %908 = vmatpush.msra.mxu0 0.0
    %909 = vmatpush.msra.mxu0 0.0
    %910 = vmatpush.msra.mxu0 %v256
    %911 = vmatpush.msra.mxu0 %v255
    %912 = vmatmul.f32.gmra.mxu0 %v894
    %v913 = vpop.f32.mrf.mxu0
    %v914 = vadd.f32 0.0, %v913
    %915 = vdwg.mxu0
    %v917 = vsel %vm754, %v753, 0
    %919 = vmatpush.msra.mxu0 0.0
    %920 = vmatpush.msra.mxu0 0.0
    %921 = vmatpush.msra.mxu0 0.0
    %922 = vmatpush.msra.mxu0 0.0
    %923 = vmatpush.msra.mxu0 0.0
    %924 = vmatpush.msra.mxu0 0.0
    %925 = vmatpush.msra.mxu0 0.0
    %926 = vmatpush.msra.mxu0 0.0
    %927 = vmatpush.msra.mxu0 0.0
    %928 = vmatpush.msra.mxu0 0.0
    %929 = vmatpush.msra.mxu0 0.0
    %930 = vmatpush.msra.mxu0 0.0
    %931 = vmatpush.msra.mxu0 0.0
    %932 = vmatpush.msra.mxu0 0.0
    %933 = vmatpush.msra.mxu0 %v258
    %934 = vmatpush.msra.mxu0 %v257
    %935 = vmatmul.f32.gmra.mxu0 %v917
    %v936 = vpop.f32.mrf.mxu0
    %v937 = vadd.f32 0.0, %v936
    %938 = vdwg.mxu0
    %v939 = vld [vmem:[%s9] sm:$0xff]
    %v940 = vld [vmem:[%s9 + $0x8] sm:$0xff]
    %v941 = vld [vmem:[%s9 + $0x10] sm:$0xff]
    %v942 = vld [vmem:[%s9 + $0x18] sm:$0xff]
    %v943 = vld [vmem:[%s9 + $0x20] sm:$0xff]
    %v944 = vld [vmem:[%s9 + $0x28] sm:$0xff]
    %v945 = vld [vmem:[%s9 + $0x30] sm:$0xff]
    %v946 = vld [vmem:[%s9 + $0x38] sm:$0xff]
    %v947 = vld [vmem:[#allocation11] sm:$0xff]
    %v948 = vld [vmem:[#allocation11 + $0x8] sm:$0xff]
    %v949 = vld [vmem:[#allocation11 + $0x10] sm:$0xff]
    %v950 = vld [vmem:[#allocation11 + $0x18] sm:$0xff]
    %951 = vmatpush.msra.mxu0 0.0
    %952 = vmatpush.msra.mxu0 0.0
    %953 = vmatpush.msra.mxu0 0.0
    %954 = vmatpush.msra.mxu0 0.0
    %955 = vmatpush.msra.mxu0 0.0
    %956 = vmatpush.msra.mxu0 0.0
    %957 = vmatpush.msra.mxu0 0.0
    %958 = vmatpush.msra.mxu0 0.0
    %959 = vmatpush.msra.mxu0 0.0
    %960 = vmatpush.msra.mxu0 0.0
    %961 = vmatpush.msra.mxu0 0.0
    %962 = vmatpush.msra.mxu0 0.0
    %963 = vmatpush.msra.mxu0 %v950
    %964 = vmatpush.msra.mxu0 %v949
    %965 = vmatpush.msra.mxu0 %v948
    %966 = vmatpush.msra.mxu0 %v947
    %967 = vmatmul.f32.gmra.mxu0 %v266
    %v968 = vpop.f32.mrf.mxu0
    %v969 = vadd.f32 0.0, %v968
    %970 = vdwg.mxu0
    %v979 = vrot.slane %v799, 7
    %vm980 = vcmask 1041409
    %v981 = vsel %vm980, %v979, %v776
    %v982 = vrot.slane %v822, 6
    %vm983 = vcmask 1042434
    %v984 = vsel %vm983, %v982, %v981
    %v985 = vrot.slane %v845, 5
    %vm986 = vcmask 1043459
    %v987 = vsel %vm986, %v985, %v984
    %v988 = vrot.slane %v868, 4
    %vm989 = vcmask 1044484
    %v990 = vsel %vm989, %v988, %v987
    %v991 = vrot.slane %v891, 3
    %vm992 = vcmask 1045509
    %v993 = vsel %vm992, %v991, %v990
    %v994 = vrot.slane %v914, 2
    %vm995 = vcmask 1046534
    %v996 = vsel %vm995, %v994, %v993
    %v997 = vrot.slane %v937, 1
    %vm998 = vcmask 1047559
    %v999 = vsel %vm998, %v997, %v996
    %v1000 = vsel %vm296, %v999, 0
    %1002 = vmatpush.msra.mxu0 0.0
    %1003 = vmatpush.msra.mxu0 0.0
    %1004 = vmatpush.msra.mxu0 0.0
    %1005 = vmatpush.msra.mxu0 0.0
    %1006 = vmatpush.msra.mxu0 0.0
    %1007 = vmatpush.msra.mxu0 0.0
    %1008 = vmatpush.msra.mxu0 0.0
    %1009 = vmatpush.msra.mxu0 0.0
    %1010 = vmatpush.msra.mxu0 %v946
    %1011 = vmatpush.msra.mxu0 %v945
    %1012 = vmatpush.msra.mxu0 %v944
    %1013 = vmatpush.msra.mxu0 %v943
    %1014 = vmatpush.msra.mxu0 %v942
    %1015 = vmatpush.msra.mxu0 %v941
    %1016 = vmatpush.msra.mxu0 %v940
    %1017 = vmatpush.msra.mxu0 %v939
    %1018 = vmatmul.f32.gmra.mxu0 %v1000
    %v1019 = vpop.f32.mrf.mxu0
    %v1020 = vadd.f32 %v969, %v1019
    %1021 = vdwg.mxu0
    %v1022 = vld [vmem:[%s11] sm:$0x1]
    %v1024 = vperm.slane %v1022, 0
    %v1026 = vadd.f32 %v1020, %v1024
    %v1027 = vld [vmem:[%s12] sm:$0xff]
    %v1028 = vld [vmem:[%s12 + $0x8] sm:$0xff]
    %v1029 = vld [vmem:[%s12 + $0x10] sm:$0xff]
    %v1030 = vld [vmem:[%s12 + $0x18] sm:$0xff]
    %v1031 = vld [vmem:[%s12 + $0x20] sm:$0xff]
    %v1032 = vld [vmem:[%s12 + $0x28] sm:$0xff]
    %v1033 = vld [vmem:[%s12 + $0x30] sm:$0xff]
    %v1034 = vld [vmem:[%s12 + $0x38] sm:$0xff]
    %v1035 = vld [vmem:[%s13] sm:$0xff]
    %v1036 = vld [vmem:[%s13 + $0x8] sm:$0xff]
    %v1037 = vld [vmem:[%s13 + $0x10] sm:$0xff]
    %v1038 = vld [vmem:[%s13 + $0x18] sm:$0xff]
    %1039 = vmatpush.msra.mxu0 0.0
    %1040 = vmatpush.msra.mxu0 0.0
    %1041 = vmatpush.msra.mxu0 0.0
    %1042 = vmatpush.msra.mxu0 0.0
    %1043 = vmatpush.msra.mxu0 0.0
    %1044 = vmatpush.msra.mxu0 0.0
    %1045 = vmatpush.msra.mxu0 0.0
    %1046 = vmatpush.msra.mxu0 0.0
    %1047 = vmatpush.msra.mxu0 0.0
    %1048 = vmatpush.msra.mxu0 0.0
    %1049 = vmatpush.msra.mxu0 0.0
    %1050 = vmatpush.msra.mxu0 0.0
    %1051 = vmatpush.msra.mxu0 %v1038
    %1052 = vmatpush.msra.mxu0 %v1037
    %1053 = vmatpush.msra.mxu0 %v1036
    %1054 = vmatpush.msra.mxu0 %v1035
    %1055 = vmatmul.f32.gmra.mxu0 %v266
    %v1056 = vpop.f32.mrf.mxu0
    %v1057 = vadd.f32 0.0, %v1056
    %1058 = vdwg.mxu0
    %1059 = vmatpush.msra.mxu0 0.0
    %1060 = vmatpush.msra.mxu0 0.0
    %1061 = vmatpush.msra.mxu0 0.0
    %1062 = vmatpush.msra.mxu0 0.0
    %1063 = vmatpush.msra.mxu0 0.0
    %1064 = vmatpush.msra.mxu0 0.0
    %1065 = vmatpush.msra.mxu0 0.0
    %1066 = vmatpush.msra.mxu0 0.0
    %1067 = vmatpush.msra.mxu0 %v1034
    %1068 = vmatpush.msra.mxu0 %v1033
    %1069 = vmatpush.msra.mxu0 %v1032
    %1070 = vmatpush.msra.mxu0 %v1031
    %1071 = vmatpush.msra.mxu0 %v1030
    %1072 = vmatpush.msra.mxu0 %v1029
    %1073 = vmatpush.msra.mxu0 %v1028
    %1074 = vmatpush.msra.mxu0 %v1027
    %1075 = vmatmul.f32.gmra.mxu0 %v1000
    %v1076 = vpop.f32.mrf.mxu0
    %v1077 = vadd.f32 %v1057, %v1076
    %1078 = vdwg.mxu0
    %v1079 = vld [vmem:[%s14] sm:$0xff]
    %v1080 = vld [vmem:[%s14 + $0x8] sm:$0xff]
    %v1081 = vld [vmem:[%s14 + $0x10] sm:$0xff]
    %v1082 = vld [vmem:[%s14 + $0x18] sm:$0xff]
    %1083 = vmatpush.msra.mxu0 0.0
    %1084 = vmatpush.msra.mxu0 0.0
    %1085 = vmatpush.msra.mxu0 0.0
    %1086 = vmatpush.msra.mxu0 0.0
    %1087 = vmatpush.msra.mxu0 0.0
    %1088 = vmatpush.msra.mxu0 0.0
    %1089 = vmatpush.msra.mxu0 0.0
    %1090 = vmatpush.msra.mxu0 0.0
    %1091 = vmatpush.msra.mxu0 0.0
    %1092 = vmatpush.msra.mxu0 0.0
    %1093 = vmatpush.msra.mxu0 0.0
    %1094 = vmatpush.msra.mxu0 0.0
    %1095 = vmatpush.msra.mxu0 %v1082
    %1096 = vmatpush.msra.mxu0 %v1081
    %1097 = vmatpush.msra.mxu0 %v1080
    %1098 = vmatpush.msra.mxu0 %v1079
    %1099 = vmatmul.f32.gmra.mxu0 %v148
    %v1100 = vpop.f32.mrf.mxu0
    %v1101 = vadd.f32 0.0, %v1100
    %1102 = vdwg.mxu0
    %v1103 = vadd.f32 %v1077, %v1101
    %v1104 = vld [vmem:[#allocation2] sm:$0x1]
    %v1106 = vperm.slane %v1104, 0
    %v1108 = vadd.f32 %v1103, %v1106
    %v1109 = vxor.u32 %v1108, 2147483648
    %v1110 = vmul.f32 %v1109, 1.442695
    %v1111 = vpow.pop %v1110
    %v1112 = vadd.f32 %v1111, 1.0
    %v1113 = vrcp.pop %v1112
    %v1114 = vmul.f32 %v1112, %v1113
    %v1115 = vsub.f32 1.0, %v1114
    %v1116 = vmul.f32 %v1113, %v1115
    %v1117 = vadd.f32 %v1113, %v1116
    %vm1118 = vweird.f32 %v1112
    %vm1119 = vweird.f32 %v1113
    %vm1120 = vmor %vm1118, %vm1119
    %v1121 = vsel %vm1120, %v1113, %v1117
    %v1122 = vand.u32 2147483647, %v1112
    %vm1123 = vcmp.eq.f32.partialorder %v1122, 8.507059e+37
    %v1124 = vand.u32 %v1112, 2147483648
    %v1125 = vor.u32 1.1754944e-38, %v1124
    %v1126 = vsel %vm1123, %v1125, %v1121
    %v1127 = vmul.f32 1.0, %v1126
    %1129 = vst.msk [vmem:[#allocation12] sm:$0xff] %vm146, %v265
    %1131 = vst.msk [vmem:[#allocation13] sm:$0xff] %vm296, %v999
    %v1132 = vrot.slane %v747, 7
    %v1133 = vsel %vm980, %v1132, %v746
    %v1134 = vrot.slane %v748, 6
    %v1135 = vsel %vm983, %v1134, %v1133
    %v1136 = vrot.slane %v749, 5
    %v1137 = vsel %vm986, %v1136, %v1135
    %v1138 = vrot.slane %v750, 4
    %v1139 = vsel %vm989, %v1138, %v1137
    %v1140 = vrot.slane %v751, 3
    %v1141 = vsel %vm992, %v1140, %v1139
    %v1142 = vrot.slane %v752, 2
    %v1143 = vsel %vm995, %v1142, %v1141
    %v1144 = vrot.slane %v753, 1
    %v1145 = vsel %vm998, %v1144, %v1143
    %1147 = vst.msk [vmem:[#allocation15] sm:$0xff] %vm754, %v1145
    %vm1148 = vcmask 7168
    %1149 = vst.msk [vmem:[%s19] sm:$0xff] %vm1148, %v1127
    %v1150 = vpack.c.bf16 %v1026, %v1026
    %vm1151 = vcmask 257024
    %1152 = vst.msk [vmem:[#allocation16] sm:$0xf] %vm1151, %v1150
    %v1153 = vsub.f32 1.0, %v1127
    %1155 = vset.pattern.permute.xlu0 0
    %1156 = vperm.xlu0 %1155, %v1153
    %v1157 = vpop.permute.xlu0 %1156
    %v1159 = vmul.f32 %v1157, %v1145
    %1160 = vst.msk [vmem:[#allocation18] sm:$0xff] %vm754, %v1159
    // Predicated region
    $region86: #{tpu_custom_call.1} parent=1 // pred_check
      _
    $region87: #{tpu_custom_call.1} parent=1 // pred_check_branch
      %1162 = sbr.rel (0) target = $region89
    $region88: #{tpu_custom_call.1} parent=1 // pred_region
      %1164 = vsyncadd [#allocation5], 0
      %s1166 = sshll.u32 [#allocation12], 4
      %s1167 = int_to_ptr.vmem [resolvable:$true] %s1166
      %s1168 = sshll.u32 %s16, 4
      %s1169 = int_to_ptr.hbm [resolvable:$true] %s1168
      %1171 = dma.vmem_to_hbm [thread:$0]  %s1167, 128, %s1169, [#allocation5]
    $region89: #{tpu_custom_call.1} parent=1 // pred_fallthru
      _
    // Predicated region
    $region90: #{tpu_custom_call.1} parent=1 // pred_check
      _
    $region91: #{tpu_custom_call.1} parent=1 // pred_check_branch
      %1173 = sbr.rel (0) target = $region93
    $region92: #{tpu_custom_call.1} parent=1 // pred_region
      %1175 = vsyncadd [#allocation14], 0
      %s1177 = sshll.u32 [#allocation13], 4
      %s1178 = int_to_ptr.vmem [resolvable:$true] %s1177
      %s1179 = sshll.u32 %s17, 4
      %s1180 = int_to_ptr.hbm [resolvable:$true] %s1179
      %1182 = dma.vmem_to_hbm [thread:$0]  %s1178, 128, %s1180, [#allocation14]
    $region93: #{tpu_custom_call.1} parent=1 // pred_fallthru
      _
    // Predicated region
    $region94: #{tpu_custom_call.1} parent=1 // pred_check
      _
    $region95: #{tpu_custom_call.1} parent=1 // pred_check_branch
      %1184 = sbr.rel (0) target = $region97
    $region96: #{tpu_custom_call.1} parent=1 // pred_region
      %1186 = vsyncadd [#allocation14], 0
      %s1188 = sshll.u32 [#allocation15], 4
      %s1189 = int_to_ptr.vmem [resolvable:$true] %s1188
      %s1190 = sshll.u32 %s18, 4
      %s1191 = int_to_ptr.hbm [resolvable:$true] %s1190
      %1193 = dma.vmem_to_hbm [thread:$0]  %s1189, 128, %s1191, [#allocation14]
    $region97: #{tpu_custom_call.1} parent=1 // pred_fallthru
      _
    // Predicated region
    $region98: #{tpu_custom_call.1} parent=1 // pred_check
      _
    $region99: #{tpu_custom_call.1} parent=1 // pred_check_branch
      %1195 = sbr.rel (0) target = $region101
    $region100: #{tpu_custom_call.1} parent=1 // pred_region
      _
    $region101: #{tpu_custom_call.1} parent=1 // pred_fallthru
      _
    // Predicated region
    $region102: #{tpu_custom_call.1} parent=1 // pred_check
      _
    $region103: #{tpu_custom_call.1} parent=1 // pred_check_branch
      %1197 = sbr.rel (0) target = $region105
    $region104: #{tpu_custom_call.1} parent=1 // pred_region
      %1199 = vsyncadd [#allocation17], 0
      %s1201 = sshll.u32 [#allocation16], 4
      %s1202 = int_to_ptr.vmem [resolvable:$true] %s1201
      %s1203 = sshll.u32 %s20, 4
      %s1204 = int_to_ptr.hbm [resolvable:$true] %s1203
      %1206 = dma.vmem_to_hbm [thread:$0]  %s1202, 64, %s1204, [#allocation17]
    $region105: #{tpu_custom_call.1} parent=1 // pred_fallthru
      _
    // Predicated region
    $region106: #{tpu_custom_call.1} parent=1 // pred_check
      _
    $region107: #{tpu_custom_call.1} parent=1 // pred_check_branch
      %1208 = sbr.rel (0) target = $region109
    $region108: #{tpu_custom_call.1} parent=1 // pred_region
      %1210 = vsyncadd [#allocation17], 0
      %s1212 = sshll.u32 [#allocation18], 4
      %s1213 = int_to_ptr.vmem [resolvable:$true] %s1212
      %s1214 = sshll.u32 %s21, 4
      %s1215 = int_to_ptr.hbm [resolvable:$true] %s1214
      %1217 = dma.vmem_to_hbm [thread:$0]  %s1213, 128, %s1215, [#allocation17]
    $region109: #{tpu_custom_call.1} parent=1 // pred_fallthru
      _
    // Predicated region
    $region110: #{tpu_custom_call.1} parent=1 // pred_check
      _
    $region111: #{tpu_custom_call.1} parent=1 // pred_check_branch
      %1219 = sbr.rel (0) target = $region113
    $region112: #{tpu_custom_call.1} parent=1 // pred_region
      %1221 = dma.done [#allocation5], 128
    $region113: #{tpu_custom_call.1} parent=1 // pred_fallthru
      _
    // Predicated region
    $region114: #{tpu_custom_call.1} parent=1 // pred_check
      _
    $region115: #{tpu_custom_call.1} parent=1 // pred_check_branch
      %1223 = sbr.rel (0) target = $region117
    $region116: #{tpu_custom_call.1} parent=1 // pred_region
      %1225 = dma.done [#allocation14], 128
    $region117: #{tpu_custom_call.1} parent=1 // pred_fallthru
      _
    // Predicated region
    $region118: #{tpu_custom_call.1} parent=1 // pred_check
      _
    $region119: #{tpu_custom_call.1} parent=1 // pred_check_branch
      %1227 = sbr.rel (0) target = $region121
    $region120: #{tpu_custom_call.1} parent=1 // pred_region
      %1229 = dma.done [#allocation14], 128
    $region121: #{tpu_custom_call.1} parent=1 // pred_fallthru
      _
    // Predicated region
    $region122: #{tpu_custom_call.1} parent=1 // pred_check
      _
    $region123: #{tpu_custom_call.1} parent=1 // pred_check_branch
      %1231 = sbr.rel (0) target = $region125
    $region124: #{tpu_custom_call.1} parent=1 // pred_region
      _
    $region125: #{tpu_custom_call.1} parent=1 // pred_fallthru
      _
    // Predicated region
    $region126: #{tpu_custom_call.1} parent=1 // pred_check
      _
    $region127: #{tpu_custom_call.1} parent=1 // pred_check_branch
      %1233 = sbr.rel (0) target = $region129
    $region128: #{tpu_custom_call.1} parent=1 // pred_region
      %1235 = dma.done [#allocation17], 64
    $region129: #{tpu_custom_call.1} parent=1 // pred_fallthru
      _
    // Predicated region
    $region130: #{tpu_custom_call.1} parent=1 // pred_check
      _
    $region131: #{tpu_custom_call.1} parent=1 // pred_check_branch
      %1237 = sbr.rel (0) target = $region133
    $region132: #{tpu_custom_call.1} parent=1 // pred_region
      %1239 = dma.done [#allocation17], 128
    $region133: #{tpu_custom_call.1} parent=1 // pred_fallthru
      _
    %1240 = vsyncpa [#allocation4], 1
    %1241 = vsyncpa [#allocation7], 1
    %1242 = vsyncpa [#allocation10], 1
    %1243 = vsyncpa [#allocation5], 1
    %1244 = vsyncpa [#allocation14], 1
    %1245 = vsyncpa [#allocation17], 1

</llo_original>
